<compile_context>
chip_gen: v7x
topology: tpu7x:2x2x1
jax: 0.10.0
libtpu: 0.0.40
codegen_flags: <defaults>
</compile_context>

<pallas_src>
import functools

import jax
import jax.numpy as jnp
from jax.experimental import pallas as pl
from jax.experimental.pallas import tpu as pltpu


# --------------------------- main streaming kernel ---------------------------

def _center_reg_kernel(pts_ref, w1_ref, b1_ref, w2_ref, b2_ref, w3_ref, b3_ref,
                       gmax_ref, *, n_tile, n_valid_last, conv1_on_mxu):
    f32 = jnp.float32
    n_idx = pl.program_id(1)

    # ---- conv1 (K=3) + folded bn1 + relu -------------------------------------
    if conv1_on_mxu:
        # (128, 8) bf16 @ (8, n_tile) bf16 -> (128, n_tile) f32 on the MXU.
        # Pad rows 3..7 of pts and cols 3..7 of w1 are exact zeros (host-side),
        # so there is no Inf*0 / NaN*0 hazard.
        h = jnp.dot(w1_ref[...], pts_ref[0], preferred_element_type=f32)
        h = h + b1_ref[...]
    else:
        # v5e path: three broadcast multiply-adds on the VPU (MXU already busy).
        pts = pts_ref[0]                                   # (3, n_tile) f32
        w1 = w1_ref[...]                                   # (128, 3)   f32
        h = (w1[:, 0:1] * pts[0:1, :]
             + w1[:, 1:2] * pts[1:2, :]
             + w1[:, 2:3] * pts[2:3, :]
             + b1_ref[...])
    h = jnp.maximum(h, 0.0).astype(jnp.bfloat16)           # (128, n_tile)

    # ---- conv2 + folded bn2 + relu (MXU, bf16 x bf16 -> f32) ------------------
    h = jnp.dot(w2_ref[...], h, preferred_element_type=f32) + b2_ref[...]
    h = jnp.maximum(h, 0.0).astype(jnp.bfloat16)           # (128, n_tile)

    # ---- conv3 + folded bn3 + relu (MXU) --------------------------------------
    h = jnp.dot(w3_ref[...], h, preferred_element_type=f32) + b3_ref[...]
    h = jnp.maximum(h, 0.0)                                 # (256, n_tile) f32

    # ---- running global max-pool over points ----------------------------------
    # The output block index is constant over the points axis, so the output
    # block itself is the resident accumulator.  Post-ReLU values are >= 0, so
    # 0 is a neutral init value and a safe value for masked (padded) columns.
    @pl.when(n_idx == 0)
    def _():
        gmax_ref[...] = jnp.zeros_like(gmax_ref)

    def _update(ht):
        gmax_ref[0] = jnp.maximum(gmax_ref[0],
                                  jnp.max(ht, axis=1, keepdims=True))

    if n_valid_last < n_tile:
        last = pl.num_programs(1) - 1

        @pl.when(n_idx != last)                # full tiles: no mask work at all
        def _():
            _update(h)

        @pl.when(n_idx == last)                # ragged last tile only: mask pad
        def _():
            lane = jax.lax.broadcasted_iota(jnp.int32, (1, n_tile), 1)
            _update(jnp.where(lane < n_valid_last, h, 0.0))
    else:
        _update(h)


# ------------------------------- FC-head kernel ------------------------------

def _fc_head_kernel(g_ref, oh_ref, wf1a_ref, wf1b_ref, bf1_ref,
                    wf2_ref, bf2_ref, wf3_ref, bf3_ref, out_ref):
    """Batched fc1/fc2/fc3 (+ folded fcbn1/fcbn2) over all B rows at once."""
    f32 = jnp.float32
    f = (jnp.dot(g_ref[...], wf1a_ref[...], preferred_element_type=f32)
         + jnp.dot(oh_ref[...], wf1b_ref[...], preferred_element_type=f32)
         + bf1_ref[...])
    f = jnp.maximum(f, 0.0)                                 # (B, 256)
    f = jnp.dot(f, wf2_ref[...], preferred_element_type=f32) + bf2_ref[...]
    f = jnp.maximum(f, 0.0)                                 # (B, 128)
    out_ref[...] = (jnp.dot(f, wf3_ref[...], preferred_element_type=f32)
                    + bf3_ref[...])                         # (B, 3)


# ----------------------------- parameter setup -------------------------------

def init_params(key, n_classes=3, eps=1e-5, zero_fc3=True):
    """Synthetic params in PyTorch (out, in) layout with eval-mode BN folded in.

    zero_fc3=True matches nn.init.zeros_ on fc3 in the reference module.
    """
    keys = jax.random.split(key, 12)

    def lin(k, cin, cout, scale=0.1):
        kw, kb = jax.random.split(k)
        w = scale * jax.random.normal(kw, (cout, cin), jnp.float32)   # (out, in)
        b = scale * jax.random.normal(kb, (cout,), jnp.float32)
        return w, b

    def bn(k, c):
        kg, kb, km, kv = jax.random.split(k, 4)
        gamma = 1.0 + 0.1 * jax.random.normal(kg, (c,), jnp.float32)
        beta = 0.1 * jax.random.normal(kb, (c,), jnp.float32)
        mean = 0.1 * jax.random.normal(km, (c,), jnp.float32)
        var = 1.0 + 0.1 * jax.random.uniform(kv, (c,), jnp.float32)
        return gamma, beta, mean, var

    def fold(wb, bnp):
        w, b = wb
        gamma, beta, mean, var = bnp
        s = gamma / jnp.sqrt(var + eps)
        return w * s[:, None], (b - mean) * s + beta

    w1, b1 = fold(lin(keys[0], 3, 128), bn(keys[1], 128))
    w2, b2 = fold(lin(keys[2], 128, 128), bn(keys[3], 128))
    w3, b3 = fold(lin(keys[4], 128, 256), bn(keys[5], 256))
    wf1, bf1 = fold(lin(keys[6], 256 + n_classes, 256), bn(keys[7], 256))
    wf2, bf2 = fold(lin(keys[8], 256, 128), bn(keys[9], 128))

    if zero_fc3:
        wf3 = jnp.zeros((3, 128), jnp.float32)
        bf3 = jnp.zeros((3,), jnp.float32)
    else:
        wf3 = 0.1 * jax.random.normal(keys[10], (3, 128), jnp.float32)
        bf3 = 0.1 * jax.random.normal(keys[11], (3,), jnp.float32)

    return dict(w1=w1, b1=b1, w2=w2, b2=b2, w3=w3, b3=b3,
                wf1=wf1, bf1=bf1, wf2=wf2, bf2=bf2, wf3=wf3, bf3=bf3)


# --------------------------------- wrapper ------------------------------------

def _resident(arr):
    """Full-array, VMEM-resident block with a constant index map."""
    zeros = (0,) * arr.ndim
    return pl.BlockSpec(arr.shape, lambda b, n, _z=zeros: _z)


def _conv1_mxu_default():
    """Use the MXU for conv1 except on v5e (whose small MXU is already busy)."""
    try:
        kind = jax.devices()[0].device_kind.lower()
    except Exception:
        return True
    return not ("v5e" in kind or "v5 lite" in kind or "v5lite" in kind)


def center_regression_net(pts_ncl, one_hot, params, n_tile=4096,
                          conv1_on_mxu=None):
    """pts_ncl: (B, 3, N) float32 (PyTorch layout); one_hot: (B, n_classes)."""
    B, C, N = pts_ncl.shape
    assert C == 3
    nc = one_hot.shape[1]
    if conv1_on_mxu is None:
        conv1_on_mxu = _conv1_mxu_default()

    if N <= n_tile:
        n_tile = N                        # single tile per batch row; any N
    else:
        assert n_tile % 128 == 0, "n_tile must be a multiple of 128"
    n_steps = pl.cdiv(N, n_tile)
    n_valid_last = N - (n_steps - 1) * n_tile        # static Python int

    p = params
    if conv1_on_mxu:
        # Zero-pad the 3 input channels to 8 so conv1 is a K=8 MXU matmul;
        # pad rows/cols are exact zeros (no Inf*0 / NaN*0 hazard).
        pts_k = jnp.concatenate(
            [pts_ncl.astype(jnp.bfloat16),
             jnp.zeros((B, 8 - C, N), jnp.bfloat16)], axis=1)      # (B, 8, N)
        w1_k = jnp.concatenate(
            [p['w1'].astype(jnp.bfloat16),
             jnp.zeros((128, 8 - C), jnp.bfloat16)], axis=1)       # (128, 8)
        cin = 8
    else:
        pts_k = pts_ncl.astype(jnp.float32)                         # (B, 3, N)
        w1_k = p['w1']                                               # (128, 3)
        cin = 3

    w2_k = p['w2'].astype(jnp.bfloat16)           # (128, 128)
    w3_k = p['w3'].astype(jnp.bfloat16)           # (256, 128)
    b1_k = p['b1'].reshape(128, 1)
    b2_k = p['b2'].reshape(128, 1)
    b3_k = p['b3'].reshape(256, 1)

    kernel = functools.partial(_center_reg_kernel, n_tile=n_tile,
                               n_valid_last=n_valid_last,
                               conv1_on_mxu=conv1_on_mxu)

    # Stage 1: conv stack + global max-pool -> (B, 256) feature.
    gmax = pl.pallas_call(
        kernel,
        out_shape=jax.ShapeDtypeStruct((B, 256, 1), jnp.float32),
        grid_spec=pltpu.PrefetchScalarGridSpec(
            num_scalar_prefetch=0,
            grid=(B, n_steps),
            in_specs=[
                pl.BlockSpec((1, cin, n_tile), lambda b, n: (b, 0, n)),  # pts
                _resident(w1_k), _resident(b1_k),
                _resident(w2_k), _resident(b2_k),
                _resident(w3_k), _resident(b3_k),
            ],
            # constant block index over the points axis -> this output block is
            # the resident running-max accumulator (written back once per row).
            out_specs=pl.BlockSpec((1, 256, 1), lambda b, n: (b, 0, 0)),
        ),
        compiler_params=pltpu.CompilerParams(
            dimension_semantics=("parallel", "arbitrary"),
            vmem_limit_bytes=32 * 1024 * 1024,
        ),
    )(pts_k, w1_k, b1_k, w2_k, b2_k, w3_k, b3_k)

    g = gmax.reshape(B, 256)        # free (last dim is 1) -> lane-dense (B, 256)

    # Stage 2: FC head as one small batched Pallas kernel (full-array blocks).
    out = pl.pallas_call(
        _fc_head_kernel,
        out_shape=jax.ShapeDtypeStruct((B, 3), jnp.float32),
    )(g, one_hot.astype(jnp.float32),
      p['wf1'][:, :256].T,          # (256, 256)  global-feature part of fc1
      p['wf1'][:, 256:].T,          # (nc, 256)   one-hot part of fc1
      p['bf1'].reshape(1, 256),
      p['wf2'].T,                   # (256, 128)
      p['bf2'].reshape(1, 128),
      p['wf3'].T,                   # (128, 3)
      p['bf3'].reshape(1, 3))

    return out                                            # (B, 3)


# -------------------------------- reference -----------------------------------

def center_regression_net_ref(pts_ncl, one_hot, p, conv1_on_mxu=None):
    """Pure-JAX reference with the same cast points as the kernel."""
    if conv1_on_mxu is None:
        conv1_on_mxu = _conv1_mxu_default()
    f32 = jnp.float32
    x = jnp.transpose(pts_ncl, (0, 2, 1))                            # (B, N, 3)
    if conv1_on_mxu:
        h = jnp.einsum('bnc,dc->bnd', x.astype(jnp.bfloat16),
                       p['w1'].astype(jnp.bfloat16),
                       preferred_element_type=f32)
    else:
        h = jnp.einsum('bnc,dc->bnd', x.astype(f32), p['w1'])
    h = jnp.maximum(h + p['b1'], 0.0).astype(jnp.bfloat16)
    h = jnp.einsum('bnc,dc->bnd', h, p['w2'].astype(jnp.bfloat16),
                   preferred_element_type=f32) + p['b2']
    h = jnp.maximum(h, 0.0).astype(jnp.bfloat16)
    h = jnp.einsum('bnc,dc->bnd', h, p['w3'].astype(jnp.bfloat16),
                   preferred_element_type=f32) + p['b3']
    h = jnp.maximum(h, 0.0)
    g = jnp.max(h, axis=1)                                            # (B, 256)
    f = jnp.maximum(g @ p['wf1'][:, :256].T + one_hot @ p['wf1'][:, 256:].T
                    + p['bf1'], 0.0)
    f = jnp.maximum(f @ p['wf2'].T + p['bf2'], 0.0)
    return f @ p['wf3'].T + p['bf3']


# ----------------------------------- main --------------------------------------

if __name__ == "__main__":
    key = jax.random.PRNGKey(0)
    k_pts, k_oh, k_par = jax.random.split(key, 3)

    B, N, n_classes = 2, 256, 3
    pts = jax.random.normal(k_pts, (B, 3, N), jnp.float32)     # PyTorch (B, C, N)
    one_hot = jax.nn.one_hot(
        jax.random.randint(k_oh, (B,), 0, n_classes), n_classes
    ).astype(jnp.float32)

    # non-zero fc3 so the numeric check is meaningful; the module itself
    # zero-inits fc3 (use zero_fc3=True for that exact init).
    params = init_params(k_par, n_classes=n_classes, zero_fc3=False)

    # multi-tile path (grid = (2, 2)), divisible N
    out = jax.block_until_ready(
        center_regression_net(pts, one_hot, params, n_tile=128))
    ref = center_regression_net_ref(pts, one_hot, params)
    assert out.shape == (B, 3)
    assert jnp.allclose(out, ref, atol=2e-2, rtol=2e-2), (
        f"max abs err {float(jnp.max(jnp.abs(out - ref)))}")

    # ragged N -> exercises the last-tile-only masking path
    N2 = 200
    pts2 = jax.random.normal(k_pts, (B, 3, N2), jnp.float32)
    out2 = jax.block_until_ready(
        center_regression_net(pts2, one_hot, params, n_tile=128))
    ref2 = center_regression_net_ref(pts2, one_hot, params)
    assert jnp.allclose(out2, ref2, atol=2e-2, rtol=2e-2), (
        f"max abs err {float(jnp.max(jnp.abs(out2 - ref2)))}")

    print("KERNEL_OK")
</pallas_src>

<mosaic_0001>
module attributes {stable_mosaic.version = 11 : i64} {
  func.func @_center_reg_kernel(%arg0: i32, %arg1: i32, %arg2: memref<1x8x128xbf16, #tpu.memory_space<vmem>>, %arg3: memref<128x8xbf16, #tpu.memory_space<vmem>>, %arg4: memref<128x1xf32, #tpu.memory_space<vmem>>, %arg5: memref<128x128xbf16, #tpu.memory_space<vmem>>, %arg6: memref<128x1xf32, #tpu.memory_space<vmem>>, %arg7: memref<256x128xbf16, #tpu.memory_space<vmem>>, %arg8: memref<256x1xf32, #tpu.memory_space<vmem>>, %arg9: memref<1x256x1xf32, #tpu.memory_space<vmem>>) attributes {dimension_semantics = [#tpu.dimension_semantics<parallel>, #tpu.dimension_semantics<arbitrary>], iteration_bounds = array<i64: 2, 2>, scalar_prefetch = 0 : i64, scratch_operands = 0 : i64, tpu.core_type = #tpu.core_type<tc>, window_params = [{transform_indices = @transform_0, window_bounds = array<i64: 1, 8, 128>}, {pipeline_mode = #tpu.pipeline_mode<synchronous>, transform_indices = @transform_1, window_bounds = array<i64: 128, 8>}, {pipeline_mode = #tpu.pipeline_mode<synchronous>, transform_indices = @transform_2, window_bounds = array<i64: 128, 1>}, {pipeline_mode = #tpu.pipeline_mode<synchronous>, transform_indices = @transform_3, window_bounds = array<i64: 128, 128>}, {pipeline_mode = #tpu.pipeline_mode<synchronous>, transform_indices = @transform_4, window_bounds = array<i64: 128, 1>}, {pipeline_mode = #tpu.pipeline_mode<synchronous>, transform_indices = @transform_5, window_bounds = array<i64: 256, 128>}, {pipeline_mode = #tpu.pipeline_mode<synchronous>, transform_indices = @transform_6, window_bounds = array<i64: 256, 1>}, {transform_indices = @transform_7, window_bounds = array<i64: 1, 256, 1>}]} {
    %c0 = arith.constant 0 : index
    %c0_0 = arith.constant 0 : index
    %0 = vector.load %arg3[%c0, %c0_0] : memref<128x8xbf16, #tpu.memory_space<vmem>>, vector<128x8xbf16>
    %c0_1 = arith.constant 0 : index
    %c0_2 = arith.constant 0 : index
    %c0_3 = arith.constant 0 : index
    %1 = vector.load %arg2[%c0_1, %c0_2, %c0_3] : memref<1x8x128xbf16, #tpu.memory_space<vmem>>, vector<1x8x128xbf16>
    %2 = vector.shape_cast %1 : vector<1x8x128xbf16> to vector<8x128xbf16>
    %cst = arith.constant dense<0.000000e+00> : vector<128x128xf32>
    %3 = tpu.matmul %0, %2, %cst {dimension_numbers = #tpu.dot_dimension_numbers<[1], [0], [0], [1], [0, 0, 1, 1], [], []>} : vector<128x8xbf16>, vector<8x128xbf16>, vector<128x128xf32> -> vector<128x128xf32>
    %c0_4 = arith.constant 0 : index
    %c0_5 = arith.constant 0 : index
    %4 = vector.load %arg4[%c0_4, %c0_5] : memref<128x1xf32, #tpu.memory_space<vmem>>, vector<128x1xf32>
    %5 = vector.broadcast %4 : vector<128x1xf32> to vector<128x128xf32>
    %6 = arith.addf %3, %5 : vector<128x128xf32>
    %cst_6 = arith.constant 0.000000e+00 : f32
    %7 = vector.broadcast %cst_6 : f32 to vector<128x128xf32>
    %8 = arith.maximumf %6, %7 : vector<128x128xf32>
    %9 = arith.truncf %8 : vector<128x128xf32> to vector<128x128xbf16>
    %c0_7 = arith.constant 0 : index
    %c0_8 = arith.constant 0 : index
    %10 = vector.load %arg5[%c0_7, %c0_8] : memref<128x128xbf16, #tpu.memory_space<vmem>>, vector<128x128xbf16>
    %cst_9 = arith.constant dense<0.000000e+00> : vector<128x128xf32>
    %11 = tpu.matmul %10, %9, %cst_9 {dimension_numbers = #tpu.dot_dimension_numbers<[1], [0], [0], [1], [0, 0, 1, 1], [], []>} : vector<128x128xbf16>, vector<128x128xbf16>, vector<128x128xf32> -> vector<128x128xf32>
    %c0_10 = arith.constant 0 : index
    %c0_11 = arith.constant 0 : index
    %12 = vector.load %arg6[%c0_10, %c0_11] : memref<128x1xf32, #tpu.memory_space<vmem>>, vector<128x1xf32>
    %13 = vector.broadcast %12 : vector<128x1xf32> to vector<128x128xf32>
    %14 = arith.addf %11, %13 : vector<128x128xf32>
    %cst_12 = arith.constant 0.000000e+00 : f32
    %15 = vector.broadcast %cst_12 : f32 to vector<128x128xf32>
    %16 = arith.maximumf %14, %15 : vector<128x128xf32>
    %17 = arith.truncf %16 : vector<128x128xf32> to vector<128x128xbf16>
    %c0_13 = arith.constant 0 : index
    %c0_14 = arith.constant 0 : index
    %18 = vector.load %arg7[%c0_13, %c0_14] : memref<256x128xbf16, #tpu.memory_space<vmem>>, vector<256x128xbf16>
    %cst_15 = arith.constant dense<0.000000e+00> : vector<256x128xf32>
    %19 = tpu.matmul %18, %17, %cst_15 {dimension_numbers = #tpu.dot_dimension_numbers<[1], [0], [0], [1], [0, 0, 1, 1], [], []>} : vector<256x128xbf16>, vector<128x128xbf16>, vector<256x128xf32> -> vector<256x128xf32>
    %c0_16 = arith.constant 0 : index
    %c0_17 = arith.constant 0 : index
    %20 = vector.load %arg8[%c0_16, %c0_17] : memref<256x1xf32, #tpu.memory_space<vmem>>, vector<256x1xf32>
    %21 = vector.broadcast %20 : vector<256x1xf32> to vector<256x128xf32>
    %22 = arith.addf %19, %21 : vector<256x128xf32>
    %cst_18 = arith.constant 0.000000e+00 : f32
    %23 = vector.broadcast %cst_18 : f32 to vector<256x128xf32>
    %24 = arith.maximumf %22, %23 : vector<256x128xf32>
    %c0_i32 = arith.constant 0 : i32
    %25 = arith.cmpi eq, %arg1, %c0_i32 : i32
    %26 = arith.extui %25 : i1 to i32
    %c0_i32_19 = arith.constant 0 : i32
    %27 = arith.cmpi ne, %26, %c0_i32_19 : i32
    scf.if %27 {
      %cst_27 = arith.constant 0.000000e+00 : f32
      %36 = vector.broadcast %cst_27 : f32 to vector<1x256x1xf32>
      %c0_28 = arith.constant 0 : index
      %c0_29 = arith.constant 0 : index
      %c0_30 = arith.constant 0 : index
      %37 = vector.load %arg9[%c0_28, %c0_29, %c0_30] : memref<1x256x1xf32, #tpu.memory_space<vmem>>, vector<1x256x1xf32>
      tpu.vector_store %arg9[%c0_28, %c0_29, %c0_30], %36 {strides = array<i32>} : memref<1x256x1xf32, #tpu.memory_space<vmem>>, vector<1x256x1xf32>,
    } else {
    }
    %c0_20 = arith.constant 0 : index
    %c0_21 = arith.constant 0 : index
    %c0_22 = arith.constant 0 : index
    %28 = vector.load %arg9[%c0_20, %c0_21, %c0_22] : memref<1x256x1xf32, #tpu.memory_space<vmem>>, vector<1x256x1xf32>
    %29 = vector.shape_cast %28 : vector<1x256x1xf32> to vector<256x1xf32>
    %cst_23 = arith.constant dense<0xFF800000> : vector<256xf32>
    %30 = vector.multi_reduction <maximumf>, %24, %cst_23 [1] : vector<256x128xf32> to vector<256xf32>
    %31 = vector.shape_cast %30 : vector<256xf32> to vector<256x1xf32>
    %32 = arith.maximumf %29, %31 : vector<256x1xf32>
    %c0_24 = arith.constant 0 : index
    %c0_25 = arith.constant 0 : index
    %c0_26 = arith.constant 0 : index
    %33 = vector.load %arg9[%c0_24, %c0_25, %c0_26] : memref<1x256x1xf32, #tpu.memory_space<vmem>>, vector<1x256x1xf32>
    %34 = vector.shape_cast %33 : vector<1x256x1xf32> to vector<256x1xf32>
    %35 = vector.shape_cast %32 : vector<256x1xf32> to vector<1x256x1xf32>
    tpu.vector_store %arg9[%c0_24, %c0_25, %c0_26], %35 {strides = array<i32>} : memref<1x256x1xf32, #tpu.memory_space<vmem>>, vector<1x256x1xf32>,
    return
  }
  func.func @transform_0(%arg0: i32, %arg1: i32) -> (i32, i32, i32) {
    %c0_i32 = arith.constant 0 : i32
    %c0_i32_0 = arith.constant 0 : i32
    return %arg0, %c0_i32, %arg1 : i32, i32, i32
  }
  func.func @transform_1(%arg0: i32, %arg1: i32) -> (i32, i32) {
    %c0_i32 = arith.constant 0 : i32
    %c0_i32_0 = arith.constant 0 : i32
    %c0_i32_1 = arith.constant 0 : i32
    return %c0_i32, %c0_i32_0 : i32, i32
  }
  func.func @transform_2(%arg0: i32, %arg1: i32) -> (i32, i32) {
    %c0_i32 = arith.constant 0 : i32
    %c0_i32_0 = arith.constant 0 : i32
    %c0_i32_1 = arith.constant 0 : i32
    return %c0_i32, %c0_i32_0 : i32, i32
  }
  func.func @transform_3(%arg0: i32, %arg1: i32) -> (i32, i32) {
    %c0_i32 = arith.constant 0 : i32
    %c0_i32_0 = arith.constant 0 : i32
    %c0_i32_1 = arith.constant 0 : i32
    return %c0_i32, %c0_i32_0 : i32, i32
  }
  func.func @transform_4(%arg0: i32, %arg1: i32) -> (i32, i32) {
    %c0_i32 = arith.constant 0 : i32
    %c0_i32_0 = arith.constant 0 : i32
    %c0_i32_1 = arith.constant 0 : i32
    return %c0_i32, %c0_i32_0 : i32, i32
  }
  func.func @transform_5(%arg0: i32, %arg1: i32) -> (i32, i32) {
    %c0_i32 = arith.constant 0 : i32
    %c0_i32_0 = arith.constant 0 : i32
    %c0_i32_1 = arith.constant 0 : i32
    return %c0_i32, %c0_i32_0 : i32, i32
  }
  func.func @transform_6(%arg0: i32, %arg1: i32) -> (i32, i32) {
    %c0_i32 = arith.constant 0 : i32
    %c0_i32_0 = arith.constant 0 : i32
    %c0_i32_1 = arith.constant 0 : i32
    return %c0_i32, %c0_i32_0 : i32, i32
  }
  func.func @transform_7(%arg0: i32, %arg1: i32) -> (i32, i32, i32) {
    %c0_i32 = arith.constant 0 : i32
    %c0_i32_0 = arith.constant 0 : i32
    %c0_i32_1 = arith.constant 0 : i32
    return %arg0, %c0_i32, %c0_i32_0 : i32, i32, i32
  }
}

</mosaic_0001>

<llo_original>
// kernel: tpu_custom_call.1
$region0: #{tpu_custom_call.1}
  #allocation0 [shape = 'u32[]', space=smem, size = 0x4, offset = 0x4, fixed_abs, tag = 'smem constant byte address 0x4 - core index']
  #allocation1 [shape = 'u32[144,128]{1,0:T(1,128)}', space=vmem, size = 0x12000, scoped, tag = 'internal scratch']
  %s0 = inlined_call_operand.vmem [shape: bf16[2,8,256], index: 0, kind: input, shape index: {}]
  %s1 = inlined_call_operand.vmem [shape: bf16[128,8], index: 1, kind: input, shape index: {}]
  %s2 = inlined_call_operand.vmem [shape: f32[128,1], index: 2, kind: input, shape index: {}]
  %s3 = inlined_call_operand.vmem [shape: bf16[128,128], index: 3, kind: input, shape index: {}]
  %s4 = inlined_call_operand.vmem [shape: f32[128,1], index: 4, kind: input, shape index: {}]
  %s5 = inlined_call_operand.vmem [shape: bf16[256,128], index: 5, kind: input, shape index: {}]
  %s6 = inlined_call_operand.vmem [shape: f32[256,1], index: 6, kind: input, shape index: {}]
  %s7 = inlined_call_operand.vmem [shape: f32[2,256,1], index: 7, kind: output, shape index: {}]
  %s8 = sld [smem:[#allocation0]]
  $region65: #{tpu_custom_call.1} parent=0
    _
  %s10 = ssub.s32 1, %s8
  %s11 = scalar_select 0, %s10, %s8
  loop: start=0, step=1, limit=6
  $region2: #{tpu_custom_call.1} parent=0 // loop_pre_header
    _
  $region3: #{tpu_custom_call.1} parent=0 // loop_header
    %s13 = sphi 0, %s17
    %p14 = scmp.ge.s32.totalorder %s13, 6
    %s20 = sphi 0, %s32
    %s21 = sphi 0, %s28
    %s22 = sphi 0, %s20
    %s23 = sphi 0, %s21
    %s24 = sphi 0, %s22
    %s25 = sphi 0, %s23
    %s37 = sphi 0, %s39
    %s40 = sphi 0, %s37
    %s41 = sphi 0, %s40
    %s57 = sphi 0, %s41
    %s61 = sphi 0, %s61
    %s63 = sphi 0, %s61
    %s64 = sphi 0, %s63
    %s78 = sphi 0, %s64
    %s82 = sphi 0, %s82
    %s84 = sphi 0, %s82
    %s85 = sphi 0, %s84
    %s99 = sphi 0, %s85
    %s103 = sphi 0, %s103
    %s105 = sphi 0, %s103
    %s106 = sphi 0, %s105
    %s120 = sphi 0, %s106
    %s124 = sphi 0, %s124
    %s126 = sphi 0, %s124
    %s127 = sphi 0, %s126
    %s141 = sphi 0, %s127
    %s145 = sphi 0, %s145
    %s147 = sphi 0, %s145
    %s148 = sphi 0, %s147
    %s162 = sphi 0, %s148
    %s166 = sphi 0, %s166
    %s168 = sphi 0, %s166
    %s169 = sphi 0, %s168
    %s183 = sphi 0, %s169
    %s189 = sphi 0, %s191
    %s192 = sphi 0, %s189
    %s193 = sphi 0, %s192
    %s209 = sphi 0, %s193
  $region4: #{tpu_custom_call.1} parent=0 // loop_header_branch
    %16 = sbr.rel (%p14) target = $region8
  $region5: #{tpu_custom_call.1} parent=0 // loop_body
    %s18 = ssub.s32 %s13, 1
    %s19 = ssub.s32 %s13, 2
    %s26 = sadd.s32 1, %s21
    %p27 = scmp.ge.s32.totalorder %s26, 2
    %s28 = scalar_select %p27, 0, %s26
    %s29 = sadd.s32 1, %s20
    %s30 = scalar_select %p27, %s29, %s20
    %p31 = scmp.ge.s32.totalorder %s30, 2
    %s32 = scalar_select %p31, 0, %s30
    %s33 = ssub.s32 %s20, %s32
    %s34 = ssub.s32 %s21, %s28
    %s35 = sor.u32 %s33, %s34
    %p36 = scmp.eq.s32.totalorder %s35, 0
    %s38 = sadd.s32 %s37, 1
    %s39 = scalar_select %p36, %s37, %s38
    %p42 = pneg %p36
    %p43 = scmp.eq.s32.totalorder %s13, 3
    %p44 = por %p42, %p43
    %p45 = scmp.ne.s32.totalorder %s37, %s40
    %p46 = scmp.eq.s32.totalorder %s13, 0
    %p47 = por %p45, %p46
    %p48 = scmp.ne.s32.totalorder %s37, %s40
    %p49 = scmp.eq.s32.totalorder %s18, 3
    %p50 = por %p48, %p49
    %p51 = scmp.ne.s32.totalorder %s40, %s41
    %p52 = scmp.eq.s32.totalorder %s18, 0
    %p53 = por %p51, %p52
    %p54 = scmp.ne.s32.totalorder %s40, %s41
    %p55 = scmp.eq.s32.totalorder %s19, 3
    %p56 = por %p54, %p55
    %p58 = scmp.ne.s32.totalorder %s41, %s57
    %p59 = scmp.eq.s32.totalorder %s19, 0
    %p60 = por %p58, %p59
    %s62 = sadd.s32 %s61, 1
    %p65 = scmp.eq.s32.totalorder %s13, 3
    %p66 = scmp.ne.s32.totalorder %s61, %s63
    %p67 = scmp.eq.s32.totalorder %s13, 0
    %p68 = por %p66, %p67
    %p69 = scmp.ne.s32.totalorder %s61, %s63
    %p70 = scmp.eq.s32.totalorder %s18, 3
    %p71 = por %p69, %p70
    %p72 = scmp.ne.s32.totalorder %s63, %s64
    %p73 = scmp.eq.s32.totalorder %s18, 0
    %p74 = por %p72, %p73
    %p75 = scmp.ne.s32.totalorder %s63, %s64
    %p76 = scmp.eq.s32.totalorder %s19, 3
    %p77 = por %p75, %p76
    %p79 = scmp.ne.s32.totalorder %s64, %s78
    %p80 = scmp.eq.s32.totalorder %s19, 0
    %p81 = por %p79, %p80
    %s83 = sadd.s32 %s82, 1
    %p86 = scmp.eq.s32.totalorder %s13, 3
    %p87 = scmp.ne.s32.totalorder %s82, %s84
    %p88 = scmp.eq.s32.totalorder %s13, 0
    %p89 = por %p87, %p88
    %p90 = scmp.ne.s32.totalorder %s82, %s84
    %p91 = scmp.eq.s32.totalorder %s18, 3
    %p92 = por %p90, %p91
    %p93 = scmp.ne.s32.totalorder %s84, %s85
    %p94 = scmp.eq.s32.totalorder %s18, 0
    %p95 = por %p93, %p94
    %p96 = scmp.ne.s32.totalorder %s84, %s85
    %p97 = scmp.eq.s32.totalorder %s19, 3
    %p98 = por %p96, %p97
    %p100 = scmp.ne.s32.totalorder %s85, %s99
    %p101 = scmp.eq.s32.totalorder %s19, 0
    %p102 = por %p100, %p101
    %s104 = sadd.s32 %s103, 1
    %p107 = scmp.eq.s32.totalorder %s13, 3
    %p108 = scmp.ne.s32.totalorder %s103, %s105
    %p109 = scmp.eq.s32.totalorder %s13, 0
    %p110 = por %p108, %p109
    %p111 = scmp.ne.s32.totalorder %s103, %s105
    %p112 = scmp.eq.s32.totalorder %s18, 3
    %p113 = por %p111, %p112
    %p114 = scmp.ne.s32.totalorder %s105, %s106
    %p115 = scmp.eq.s32.totalorder %s18, 0
    %p116 = por %p114, %p115
    %p117 = scmp.ne.s32.totalorder %s105, %s106
    %p118 = scmp.eq.s32.totalorder %s19, 3
    %p119 = por %p117, %p118
    %p121 = scmp.ne.s32.totalorder %s106, %s120
    %p122 = scmp.eq.s32.totalorder %s19, 0
    %p123 = por %p121, %p122
    %s125 = sadd.s32 %s124, 1
    %p128 = scmp.eq.s32.totalorder %s13, 3
    %p129 = scmp.ne.s32.totalorder %s124, %s126
    %p130 = scmp.eq.s32.totalorder %s13, 0
    %p131 = por %p129, %p130
    %p132 = scmp.ne.s32.totalorder %s124, %s126
    %p133 = scmp.eq.s32.totalorder %s18, 3
    %p134 = por %p132, %p133
    %p135 = scmp.ne.s32.totalorder %s126, %s127
    %p136 = scmp.eq.s32.totalorder %s18, 0
    %p137 = por %p135, %p136
    %p138 = scmp.ne.s32.totalorder %s126, %s127
    %p139 = scmp.eq.s32.totalorder %s19, 3
    %p140 = por %p138, %p139
    %p142 = scmp.ne.s32.totalorder %s127, %s141
    %p143 = scmp.eq.s32.totalorder %s19, 0
    %p144 = por %p142, %p143
    %s146 = sadd.s32 %s145, 1
    %p149 = scmp.eq.s32.totalorder %s13, 3
    %p150 = scmp.ne.s32.totalorder %s145, %s147
    %p151 = scmp.eq.s32.totalorder %s13, 0
    %p152 = por %p150, %p151
    %p153 = scmp.ne.s32.totalorder %s145, %s147
    %p154 = scmp.eq.s32.totalorder %s18, 3
    %p155 = por %p153, %p154
    %p156 = scmp.ne.s32.totalorder %s147, %s148
    %p157 = scmp.eq.s32.totalorder %s18, 0
    %p158 = por %p156, %p157
    %p159 = scmp.ne.s32.totalorder %s147, %s148
    %p160 = scmp.eq.s32.totalorder %s19, 3
    %p161 = por %p159, %p160
    %p163 = scmp.ne.s32.totalorder %s148, %s162
    %p164 = scmp.eq.s32.totalorder %s19, 0
    %p165 = por %p163, %p164
    %s167 = sadd.s32 %s166, 1
    %p170 = scmp.eq.s32.totalorder %s13, 3
    %p171 = scmp.ne.s32.totalorder %s166, %s168
    %p172 = scmp.eq.s32.totalorder %s13, 0
    %p173 = por %p171, %p172
    %p174 = scmp.ne.s32.totalorder %s166, %s168
    %p175 = scmp.eq.s32.totalorder %s18, 3
    %p176 = por %p174, %p175
    %p177 = scmp.ne.s32.totalorder %s168, %s169
    %p178 = scmp.eq.s32.totalorder %s18, 0
    %p179 = por %p177, %p178
    %p180 = scmp.ne.s32.totalorder %s168, %s169
    %p181 = scmp.eq.s32.totalorder %s19, 3
    %p182 = por %p180, %p181
    %p184 = scmp.ne.s32.totalorder %s169, %s183
    %p185 = scmp.eq.s32.totalorder %s19, 0
    %p186 = por %p184, %p185
    %s187 = ssub.s32 %s20, %s32
    %p188 = scmp.eq.s32.totalorder %s187, 0
    %s190 = sadd.s32 %s189, 1
    %s191 = scalar_select %p188, %s189, %s190
    %p194 = pneg %p188
    %p195 = scmp.eq.s32.totalorder %s13, 3
    %p196 = por %p194, %p195
    %p197 = scmp.ne.s32.totalorder %s189, %s192
    %p198 = scmp.eq.s32.totalorder %s13, 0
    %p199 = por %p197, %p198
    %p200 = scmp.ne.s32.totalorder %s189, %s192
    %p201 = scmp.eq.s32.totalorder %s18, 3
    %p202 = por %p200, %p201
    %p203 = scmp.ne.s32.totalorder %s192, %s193
    %p204 = scmp.eq.s32.totalorder %s18, 0
    %p205 = por %p203, %p204
    %p206 = scmp.ne.s32.totalorder %s192, %s193
    %p207 = scmp.eq.s32.totalorder %s19, 3
    %p208 = por %p206, %p207
    %p210 = scmp.ne.s32.totalorder %s193, %s209
    %p211 = scmp.eq.s32.totalorder %s19, 0
    %p212 = por %p210, %p211
    %p213 = scmp.le.s32.totalorder 1, %s13
    %p214 = scmp.lt.s32.totalorder %s13, 5
    %p215 = pnand %p213, %p214
    %p216 = pneg %p215
    // Predicated region
    $region9: #{tpu_custom_call.1} parent=5 // pred_check
      _
    $region10: #{tpu_custom_call.1} parent=5 // pred_check_branch
      %218 = sbr.rel (%p215) target = $region12
    $region11: #{tpu_custom_call.1} parent=5 // pred_region
      %s219 = ssub.s32 %s13, 1
      // Predicated region
      $region13: #{tpu_custom_call.1} parent=11 // pred_check
        %p220 = pneg %p74
      $region14: #{tpu_custom_call.1} parent=11 // pred_check_branch
        %222 = sbr.rel (%p220) target = $region16
      $region15: #{tpu_custom_call.1} parent=11 // pred_region
        _
      $region16: #{tpu_custom_call.1} parent=11 // pred_fallthru
        _
      // Predicated region
      $region17: #{tpu_custom_call.1} parent=11 // pred_check
        %p223 = pneg %p95
      $region18: #{tpu_custom_call.1} parent=11 // pred_check_branch
        %225 = sbr.rel (%p223) target = $region20
      $region19: #{tpu_custom_call.1} parent=11 // pred_region
        _
      $region20: #{tpu_custom_call.1} parent=11 // pred_fallthru
        _
      // Predicated region
      $region21: #{tpu_custom_call.1} parent=11 // pred_check
        %p226 = pneg %p116
      $region22: #{tpu_custom_call.1} parent=11 // pred_check_branch
        %228 = sbr.rel (%p226) target = $region24
      $region23: #{tpu_custom_call.1} parent=11 // pred_region
        _
      $region24: #{tpu_custom_call.1} parent=11 // pred_fallthru
        _
      // Predicated region
      $region25: #{tpu_custom_call.1} parent=11 // pred_check
        %p229 = pneg %p137
      $region26: #{tpu_custom_call.1} parent=11 // pred_check_branch
        %231 = sbr.rel (%p229) target = $region28
      $region27: #{tpu_custom_call.1} parent=11 // pred_region
        _
      $region28: #{tpu_custom_call.1} parent=11 // pred_fallthru
        _
      // Predicated region
      $region29: #{tpu_custom_call.1} parent=11 // pred_check
        %p232 = pneg %p158
      $region30: #{tpu_custom_call.1} parent=11 // pred_check_branch
        %234 = sbr.rel (%p232) target = $region32
      $region31: #{tpu_custom_call.1} parent=11 // pred_region
        _
      $region32: #{tpu_custom_call.1} parent=11 // pred_fallthru
        _
      // Predicated region
      $region33: #{tpu_custom_call.1} parent=11 // pred_check
        %p235 = pneg %p179
      $region34: #{tpu_custom_call.1} parent=11 // pred_check_branch
        %237 = sbr.rel (%p235) target = $region36
      $region35: #{tpu_custom_call.1} parent=11 // pred_region
        _
      $region36: #{tpu_custom_call.1} parent=11 // pred_fallthru
        _
    $region12: #{tpu_custom_call.1} parent=5 // pred_fallthru
      _
    %p238 = scmp.lt.s32.totalorder %s13, 4
    // Predicated region
    $region37: #{tpu_custom_call.1} parent=5 // pred_check
      %p239 = pneg %p238
    $region38: #{tpu_custom_call.1} parent=5 // pred_check_branch
      %241 = sbr.rel (%p239) target = $region40
    $region39: #{tpu_custom_call.1} parent=5 // pred_region
      // Predicated region
      $region41: #{tpu_custom_call.1} parent=39 // pred_check
        %p242 = pneg %p47
      $region42: #{tpu_custom_call.1} parent=39 // pred_check_branch
        %244 = sbr.rel (%p242) target = $region44
      $region43: #{tpu_custom_call.1} parent=39 // pred_region
        %p245 = scmp.lt.s32.totalorder %s20, 1
        %s246 = scalar_select %p245, %s20, 1
        %p247 = scmp.lt.s32.totalorder %s21, 1
        %s248 = scalar_select %p247, %s21, 1
        %s249 = smul.addr %s246, 2
        %s250 = sadd.s32 %s248, %s249
        %s251 = smul.addr %s250, 4
        %s252 = scalar_lea.vmem %s0, %s251
      $region44: #{tpu_custom_call.1} parent=39 // pred_fallthru
        _
    $region40: #{tpu_custom_call.1} parent=5 // pred_fallthru
      _
    %p253 = scmp.le.s32.totalorder 1, %s13
    %p254 = scmp.lt.s32.totalorder %s13, 5
    %p255 = pnand %p253, %p254
    %p256 = pneg %p255
    // Predicated region
    $region45: #{tpu_custom_call.1} parent=5 // pred_check
      _
    $region46: #{tpu_custom_call.1} parent=5 // pred_check_branch
      %258 = sbr.rel (%p255) target = $region48
    $region47: #{tpu_custom_call.1} parent=5 // pred_region
      %s259 = ssub.s32 %s13, 1
      %p260 = scmp.lt.s32.totalorder %s22, 1
      %s261 = scalar_select %p260, %s22, 1
      %p262 = scmp.lt.s32.totalorder %s23, 1
      %s263 = scalar_select %p262, %s23, 1
      %s264 = smul.addr %s261, 2
      %s265 = sadd.s32 %s263, %s264
      %s266 = smul.addr %s265, 4
      %s267 = scalar_lea.vmem %s0, %s266
      %p268 = pneg %p53
      %p269 = pneg %p50
      %p270 = pneg %p74
      %p271 = pneg %p71
      %p272 = pneg %p95
      %p273 = pneg %p92
      %p274 = pneg %p116
      %p275 = pneg %p113
      %p276 = pneg %p137
      %p277 = pneg %p134
      %p278 = pneg %p158
      %p279 = pneg %p155
      %p280 = pneg %p179
      %p281 = pneg %p176
      %p282 = pneg %p205
      %p283 = pneg %p202
      %p284 = scmp.lt.s32.totalorder %s22, 1
      %s285 = scalar_select %p284, %s22, 1
      %s286 = smul.addr %s285, 32
      %s287 = smul.addr %s286, 8
      %s288 = scalar_lea.vmem %s7, %s287
      %p289 = scmp.lt.s32.totalorder %s22, 1
      %s290 = scalar_select %p289, %s22, 1
      %p291 = scmp.lt.s32.totalorder %s23, 1
      %s292 = scalar_select %p291, %s23, 1
      %s293 = smul.addr %s290, 2
      %s294 = sadd.s32 %s292, %s293
      %s295 = smul.addr %s294, 4
      %s296 = scalar_lea.vmem %s0, %s295
      %p297 = scmp.lt.s32.totalorder %s22, 1
      %s298 = scalar_select %p297, %s22, 1
      %s299 = smul.addr %s298, 32
      %s300 = smul.addr %s299, 8
      %s301 = scalar_lea.vmem %s7, %s300
      %v303 = vld [vmem:[%s1] sm:$0xf]
      %v304 = vld [vmem:[%s1 + $0x4] sm:$0xf]
      %v305 = vld [vmem:[%s1 + $0x8] sm:$0xf]
      %v306 = vld [vmem:[%s1 + $0xc] sm:$0xf]
      %v307 = vld [vmem:[%s1 + $0x10] sm:$0xf]
      %v308 = vld [vmem:[%s1 + $0x14] sm:$0xf]
      %v309 = vld [vmem:[%s1 + $0x18] sm:$0xf]
      %v310 = vld [vmem:[%s1 + $0x1c] sm:$0xf]
      %v311 = vld [vmem:[%s1 + $0x20] sm:$0xf]
      %v312 = vld [vmem:[%s1 + $0x24] sm:$0xf]
      %v313 = vld [vmem:[%s1 + $0x28] sm:$0xf]
      %v314 = vld [vmem:[%s1 + $0x2c] sm:$0xf]
      %v315 = vld [vmem:[%s1 + $0x30] sm:$0xf]
      %v316 = vld [vmem:[%s1 + $0x34] sm:$0xf]
      %v317 = vld [vmem:[%s1 + $0x38] sm:$0xf]
      %v318 = vld [vmem:[%s1 + $0x3c] sm:$0xf]
      %v319 = vld [vmem:[%s296] sm:$0xf]
      %v320 = vld [vmem:[%s2] sm:$0xff]
      %v321 = vld [vmem:[%s2 + $0x8] sm:$0xff]
      %v322 = vld [vmem:[%s2 + $0x10] sm:$0xff]
      %v323 = vld [vmem:[%s2 + $0x18] sm:$0xff]
      %v324 = vld [vmem:[%s2 + $0x20] sm:$0xff]
      %v325 = vld [vmem:[%s2 + $0x28] sm:$0xff]
      %v326 = vld [vmem:[%s2 + $0x30] sm:$0xff]
      %v327 = vld [vmem:[%s2 + $0x38] sm:$0xff]
      %v328 = vld [vmem:[%s2 + $0x40] sm:$0xff]
      %v329 = vld [vmem:[%s2 + $0x48] sm:$0xff]
      %v330 = vld [vmem:[%s2 + $0x50] sm:$0xff]
      %v331 = vld [vmem:[%s2 + $0x58] sm:$0xff]
      %v332 = vld [vmem:[%s2 + $0x60] sm:$0xff]
      %v333 = vld [vmem:[%s2 + $0x68] sm:$0xff]
      %v334 = vld [vmem:[%s2 + $0x70] sm:$0xff]
      %v335 = vld [vmem:[%s2 + $0x78] sm:$0xff]
      %337 = vset.pattern.permute.xlu0 0
      %338 = vperm.xlu0 %337, %v320
      %v339 = vpop.permute.xlu0 %338
      %342 = vset.pattern.permute.xlu0 0
      %343 = vperm.xlu0 %342, %v321
      %v344 = vpop.permute.xlu0 %343
      %347 = vset.pattern.permute.xlu0 0
      %348 = vperm.xlu0 %347, %v322
      %v349 = vpop.permute.xlu0 %348
      %352 = vset.pattern.permute.xlu0 0
      %353 = vperm.xlu0 %352, %v323
      %v354 = vpop.permute.xlu0 %353
      %357 = vset.pattern.permute.xlu0 0
      %358 = vperm.xlu0 %357, %v324
      %v359 = vpop.permute.xlu0 %358
      %362 = vset.pattern.permute.xlu0 0
      %363 = vperm.xlu0 %362, %v325
      %v364 = vpop.permute.xlu0 %363
      %367 = vset.pattern.permute.xlu0 0
      %368 = vperm.xlu0 %367, %v326
      %v369 = vpop.permute.xlu0 %368
      %372 = vset.pattern.permute.xlu0 0
      %373 = vperm.xlu0 %372, %v327
      %v374 = vpop.permute.xlu0 %373
      %377 = vset.pattern.permute.xlu0 0
      %378 = vperm.xlu0 %377, %v328
      %v379 = vpop.permute.xlu0 %378
      %382 = vset.pattern.permute.xlu0 0
      %383 = vperm.xlu0 %382, %v329
      %v384 = vpop.permute.xlu0 %383
      %387 = vset.pattern.permute.xlu0 0
      %388 = vperm.xlu0 %387, %v330
      %v389 = vpop.permute.xlu0 %388
      %392 = vset.pattern.permute.xlu0 0
      %393 = vperm.xlu0 %392, %v331
      %v394 = vpop.permute.xlu0 %393
      %397 = vset.pattern.permute.xlu0 0
      %398 = vperm.xlu0 %397, %v332
      %v399 = vpop.permute.xlu0 %398
      %402 = vset.pattern.permute.xlu0 0
      %403 = vperm.xlu0 %402, %v333
      %v404 = vpop.permute.xlu0 %403
      %407 = vset.pattern.permute.xlu0 0
      %408 = vperm.xlu0 %407, %v334
      %v409 = vpop.permute.xlu0 %408
      %412 = vset.pattern.permute.xlu0 0
      %413 = vperm.xlu0 %412, %v335
      %v414 = vpop.permute.xlu0 %413
      %v432 = vunpack.c.l.b16 %v303
      %v433 = vunpack.c.l.b16 %v304
      %v434 = vunpack.c.l.b16 %v305
      %v435 = vunpack.c.l.b16 %v306
      %v436 = vunpack.c.l.b16 %v307
      %v437 = vunpack.c.l.b16 %v308
      %v438 = vunpack.c.l.b16 %v309
      %v439 = vunpack.c.l.b16 %v310
      %v440 = vunpack.c.l.b16 %v311
      %v441 = vunpack.c.l.b16 %v312
      %v442 = vunpack.c.l.b16 %v313
      %v443 = vunpack.c.l.b16 %v314
      %v444 = vunpack.c.l.b16 %v315
      %v445 = vunpack.c.l.b16 %v316
      %v446 = vunpack.c.l.b16 %v317
      %v447 = vunpack.c.l.b16 %v318
      %v448 = vpack.c.b16 %v433, %v432
      %v449 = vpack.c.b16 %v435, %v434
      %v450 = vpack.c.b16 %v437, %v436
      %v451 = vpack.c.b16 %v439, %v438
      %v452 = vpack.c.b16 %v441, %v440
      %v453 = vpack.c.b16 %v443, %v442
      %v454 = vpack.c.b16 %v445, %v444
      %v455 = vpack.c.b16 %v447, %v446
      %vm456 = vcmask 64512
      %v458 = vsel %vm456, %v448, 0
      %v461 = vsel %vm456, %v449, 0
      %v464 = vsel %vm456, %v450, 0
      %v467 = vsel %vm456, %v451, 0
      %v470 = vsel %vm456, %v452, 0
      %v473 = vsel %vm456, %v453, 0
      %v476 = vsel %vm456, %v454, 0
      %v479 = vsel %vm456, %v455, 0
      %vm481 = vcmask 1043456
      %v483 = vsel %vm481, %v319, 0
      %485 = vmatprep.subr.bf16.mxu0 0
      %486 = vmatpush1.bf16.msra.mxu0 %v483
      %487 = vmatprep.subr.bf16.mxu0 0
      %488 = vmatpush1.bf16.msra.mxu0 0
      %489 = vmatprep.subr.bf16.mxu0 0
      %490 = vmatpush1.bf16.msra.mxu0 0
      %491 = vmatprep.subr.bf16.mxu0 0
      %492 = vmatpush1.bf16.msra.mxu0 0
      %493 = vmatprep.subr.bf16.mxu0 0
      %494 = vmatpush1.bf16.msra.mxu0 0
      %495 = vmatprep.subr.bf16.mxu0 0
      %496 = vmatpush1.bf16.msra.mxu0 0
      %497 = vmatprep.subr.bf16.mxu0 0
      %498 = vmatpush1.bf16.msra.mxu0 0
      %499 = vmatprep.subr.bf16.mxu0 0
      %500 = vmatpush1.bf16.msra.mxu0 0
      %501 = vmatprep.subr.bf16.mxu0 0
      %502 = vmatpush1.bf16.msra.mxu0 0
      %503 = vmatprep.subr.bf16.mxu0 0
      %504 = vmatpush1.bf16.msra.mxu0 0
      %505 = vmatprep.subr.bf16.mxu0 0
      %506 = vmatpush1.bf16.msra.mxu0 0
      %507 = vmatprep.subr.bf16.mxu0 0
      %508 = vmatpush1.bf16.msra.mxu0 0
      %509 = vmatprep.subr.bf16.mxu0 0
      %510 = vmatpush1.bf16.msra.mxu0 0
      %511 = vmatprep.subr.bf16.mxu0 0
      %512 = vmatpush1.bf16.msra.mxu0 0
      %513 = vmatprep.subr.bf16.mxu0 0
      %514 = vmatpush1.bf16.msra.mxu0 0
      %515 = vmatprep.subr.bf16.mxu0 0
      %516 = vmatpush1.bf16.msra.mxu0 0
      %517 = vmatprep.mubr.bf16.mxu0 0
      %518 = vmatmul.mubr.bf16.gmra.mrb[0].mxu0 %v458
      %v519 = vpop.f32.mrb[0].mxu0
      %v520 = vadd.f32 %v339, %v519
      %v521 = vpop.f32.mrb[0].mxu0
      %v522 = vpop.f32.mrb[0].mxu0
      %v523 = vadd.f32 %v344, %v522
      %v524 = vpop.f32.mrb[0].mxu0
      %525 = vmatprep.mubr.bf16.mxu0 0
      %526 = vmatmul.mubr.bf16.gmra.mrb[0].mxu0 %v461
      %v527 = vpop.f32.mrb[0].mxu0
      %v528 = vadd.f32 %v349, %v527
      %v529 = vpop.f32.mrb[0].mxu0
      %v530 = vpop.f32.mrb[0].mxu0
      %v531 = vadd.f32 %v354, %v530
      %v532 = vpop.f32.mrb[0].mxu0
      %533 = vmatprep.mubr.bf16.mxu0 0
      %534 = vmatmul.mubr.bf16.gmra.mrb[0].mxu0 %v464
      %v535 = vpop.f32.mrb[0].mxu0
      %v536 = vadd.f32 %v359, %v535
      %v537 = vpop.f32.mrb[0].mxu0
      %v538 = vpop.f32.mrb[0].mxu0
      %v539 = vadd.f32 %v364, %v538
      %v540 = vpop.f32.mrb[0].mxu0
      %541 = vmatprep.mubr.bf16.mxu0 0
      %542 = vmatmul.mubr.bf16.gmra.mrb[0].mxu0 %v467
      %v543 = vpop.f32.mrb[0].mxu0
      %v544 = vadd.f32 %v369, %v543
      %v545 = vpop.f32.mrb[0].mxu0
      %v546 = vpop.f32.mrb[0].mxu0
      %v547 = vadd.f32 %v374, %v546
      %v548 = vpop.f32.mrb[0].mxu0
      %549 = vmatprep.mubr.bf16.mxu0 0
      %550 = vmatmul.mubr.bf16.gmra.mrb[0].mxu0 %v470
      %v551 = vpop.f32.mrb[0].mxu0
      %v552 = vadd.f32 %v379, %v551
      %v553 = vpop.f32.mrb[0].mxu0
      %v554 = vpop.f32.mrb[0].mxu0
      %v555 = vadd.f32 %v384, %v554
      %v556 = vpop.f32.mrb[0].mxu0
      %557 = vmatprep.mubr.bf16.mxu0 0
      %558 = vmatmul.mubr.bf16.gmra.mrb[0].mxu0 %v473
      %v559 = vpop.f32.mrb[0].mxu0
      %v560 = vadd.f32 %v389, %v559
      %v561 = vpop.f32.mrb[0].mxu0
      %v562 = vpop.f32.mrb[0].mxu0
      %v563 = vadd.f32 %v394, %v562
      %v564 = vpop.f32.mrb[0].mxu0
      %565 = vmatprep.mubr.bf16.mxu0 0
      %566 = vmatmul.mubr.bf16.gmra.mrb[0].mxu0 %v476
      %v567 = vpop.f32.mrb[0].mxu0
      %v568 = vadd.f32 %v399, %v567
      %v569 = vpop.f32.mrb[0].mxu0
      %v570 = vpop.f32.mrb[0].mxu0
      %v571 = vadd.f32 %v404, %v570
      %v572 = vpop.f32.mrb[0].mxu0
      %573 = vmatprep.mubr.bf16.mxu0 0
      %574 = vmatmul.mubr.bf16.gmra.mrb[0].mxu0 %v479
      %v575 = vpop.f32.mrb[0].mxu0
      %v576 = vadd.f32 %v409, %v575
      %v577 = vpop.f32.mrb[0].mxu0
      %v578 = vpop.f32.mrb[0].mxu0
      %v579 = vadd.f32 %v414, %v578
      %v580 = vpop.f32.mrb[0].mxu0
      %581 = vdwg.mxu0
      %v582 = vmax.f32 %v520, 0.0
      %v583 = vmax.f32 %v523, 0.0
      %v584 = vmax.f32 %v528, 0.0
      %v585 = vmax.f32 %v531, 0.0
      %v586 = vmax.f32 %v536, 0.0
      %v587 = vmax.f32 %v539, 0.0
      %v588 = vmax.f32 %v544, 0.0
      %v589 = vmax.f32 %v547, 0.0
      %v590 = vmax.f32 %v552, 0.0
      %v591 = vmax.f32 %v555, 0.0
      %v592 = vmax.f32 %v560, 0.0
      %v593 = vmax.f32 %v563, 0.0
      %v594 = vmax.f32 %v568, 0.0
      %v595 = vmax.f32 %v571, 0.0
      %v596 = vmax.f32 %v576, 0.0
      %v597 = vmax.f32 %v579, 0.0
      %v598 = vpack.c.bf16 %v583, %v582
      %v599 = vpack.c.bf16 %v585, %v584
      %v600 = vpack.c.bf16 %v587, %v586
      %v601 = vpack.c.bf16 %v589, %v588
      %v602 = vpack.c.bf16 %v591, %v590
      %v603 = vpack.c.bf16 %v593, %v592
      %v604 = vpack.c.bf16 %v595, %v594
      %v605 = vpack.c.bf16 %v597, %v596
      %v606 = vld [vmem:[%s3] sm:$0xf]
      %v607 = vld [vmem:[%s3 + $0x4] sm:$0xf]
      %v608 = vld [vmem:[%s3 + $0x8] sm:$0xf]
      %v609 = vld [vmem:[%s3 + $0xc] sm:$0xf]
      %v610 = vld [vmem:[%s3 + $0x10] sm:$0xf]
      %v611 = vld [vmem:[%s3 + $0x14] sm:$0xf]
      %v612 = vld [vmem:[%s3 + $0x18] sm:$0xf]
      %v613 = vld [vmem:[%s3 + $0x1c] sm:$0xf]
      %v614 = vld [vmem:[%s3 + $0x20] sm:$0xf]
      %v615 = vld [vmem:[%s3 + $0x24] sm:$0xf]
      %v616 = vld [vmem:[%s3 + $0x28] sm:$0xf]
      %v617 = vld [vmem:[%s3 + $0x2c] sm:$0xf]
      %v618 = vld [vmem:[%s3 + $0x30] sm:$0xf]
      %v619 = vld [vmem:[%s3 + $0x34] sm:$0xf]
      %v620 = vld [vmem:[%s3 + $0x38] sm:$0xf]
      %v621 = vld [vmem:[%s3 + $0x3c] sm:$0xf]
      %v622 = vld [vmem:[%s4] sm:$0xff]
      %v623 = vld [vmem:[%s4 + $0x8] sm:$0xff]
      %v624 = vld [vmem:[%s4 + $0x10] sm:$0xff]
      %v625 = vld [vmem:[%s4 + $0x18] sm:$0xff]
      %v626 = vld [vmem:[%s4 + $0x20] sm:$0xff]
      %v627 = vld [vmem:[%s4 + $0x28] sm:$0xff]
      %v628 = vld [vmem:[%s4 + $0x30] sm:$0xff]
      %v629 = vld [vmem:[%s4 + $0x38] sm:$0xff]
      %v630 = vld [vmem:[%s4 + $0x40] sm:$0xff]
      %v631 = vld [vmem:[%s4 + $0x48] sm:$0xff]
      %v632 = vld [vmem:[%s4 + $0x50] sm:$0xff]
      %v633 = vld [vmem:[%s4 + $0x58] sm:$0xff]
      %v634 = vld [vmem:[%s4 + $0x60] sm:$0xff]
      %v635 = vld [vmem:[%s4 + $0x68] sm:$0xff]
      %v636 = vld [vmem:[%s4 + $0x70] sm:$0xff]
      %v637 = vld [vmem:[%s4 + $0x78] sm:$0xff]
      %639 = vset.pattern.permute.xlu0 0
      %640 = vperm.xlu0 %639, %v622
      %v641 = vpop.permute.xlu0 %640
      %644 = vset.pattern.permute.xlu0 0
      %645 = vperm.xlu0 %644, %v623
      %v646 = vpop.permute.xlu0 %645
      %649 = vset.pattern.permute.xlu0 0
      %650 = vperm.xlu0 %649, %v624
      %v651 = vpop.permute.xlu0 %650
      %654 = vset.pattern.permute.xlu0 0
      %655 = vperm.xlu0 %654, %v625
      %v656 = vpop.permute.xlu0 %655
      %659 = vset.pattern.permute.xlu0 0
      %660 = vperm.xlu0 %659, %v626
      %v661 = vpop.permute.xlu0 %660
      %664 = vset.pattern.permute.xlu0 0
      %665 = vperm.xlu0 %664, %v627
      %v666 = vpop.permute.xlu0 %665
      %669 = vset.pattern.permute.xlu0 0
      %670 = vperm.xlu0 %669, %v628
      %v671 = vpop.permute.xlu0 %670
      %674 = vset.pattern.permute.xlu0 0
      %675 = vperm.xlu0 %674, %v629
      %v676 = vpop.permute.xlu0 %675
      %679 = vset.pattern.permute.xlu0 0
      %680 = vperm.xlu0 %679, %v630
      %v681 = vpop.permute.xlu0 %680
      %684 = vset.pattern.permute.xlu0 0
      %685 = vperm.xlu0 %684, %v631
      %v686 = vpop.permute.xlu0 %685
      %689 = vset.pattern.permute.xlu0 0
      %690 = vperm.xlu0 %689, %v632
      %v691 = vpop.permute.xlu0 %690
      %694 = vset.pattern.permute.xlu0 0
      %695 = vperm.xlu0 %694, %v633
      %v696 = vpop.permute.xlu0 %695
      %699 = vset.pattern.permute.xlu0 0
      %700 = vperm.xlu0 %699, %v634
      %v701 = vpop.permute.xlu0 %700
      %704 = vset.pattern.permute.xlu0 0
      %705 = vperm.xlu0 %704, %v635
      %v706 = vpop.permute.xlu0 %705
      %709 = vset.pattern.permute.xlu0 0
      %710 = vperm.xlu0 %709, %v636
      %v711 = vpop.permute.xlu0 %710
      %714 = vset.pattern.permute.xlu0 0
      %715 = vperm.xlu0 %714, %v637
      %v716 = vpop.permute.xlu0 %715
      %v734 = vunpack.c.l.b16 %v606
      %v735 = vunpack.c.l.b16 %v607
      %v736 = vunpack.c.l.b16 %v608
      %v737 = vunpack.c.l.b16 %v609
      %v738 = vunpack.c.l.b16 %v610
      %v739 = vunpack.c.l.b16 %v611
      %v740 = vunpack.c.l.b16 %v612
      %v741 = vunpack.c.l.b16 %v613
      %v742 = vunpack.c.l.b16 %v614
      %v743 = vunpack.c.l.b16 %v615
      %v744 = vunpack.c.l.b16 %v616
      %v745 = vunpack.c.l.b16 %v617
      %v746 = vunpack.c.l.b16 %v618
      %v747 = vunpack.c.l.b16 %v619
      %v748 = vunpack.c.l.b16 %v620
      %v749 = vunpack.c.l.b16 %v621
      %v750 = vpack.c.b16 %v735, %v734
      %v751 = vpack.c.b16 %v737, %v736
      %v752 = vpack.c.b16 %v739, %v738
      %v753 = vpack.c.b16 %v741, %v740
      %v754 = vpack.c.b16 %v743, %v742
      %v755 = vpack.c.b16 %v745, %v744
      %v756 = vpack.c.b16 %v747, %v746
      %v757 = vpack.c.b16 %v749, %v748
      %766 = vmatprep.subr.bf16.mxu0 0
      %767 = vmatpush1.bf16.msra.mxu0 %v598
      %768 = vmatprep.subr.bf16.mxu0 0
      %769 = vmatpush1.bf16.msra.mxu0 %v599
      %770 = vmatprep.subr.bf16.mxu0 0
      %771 = vmatpush1.bf16.msra.mxu0 %v600
      %772 = vmatprep.subr.bf16.mxu0 0
      %773 = vmatpush1.bf16.msra.mxu0 %v601
      %774 = vmatprep.subr.bf16.mxu0 0
      %775 = vmatpush1.bf16.msra.mxu0 %v602
      %776 = vmatprep.subr.bf16.mxu0 0
      %777 = vmatpush1.bf16.msra.mxu0 %v603
      %778 = vmatprep.subr.bf16.mxu0 0
      %779 = vmatpush1.bf16.msra.mxu0 %v604
      %780 = vmatprep.subr.bf16.mxu0 0
      %781 = vmatpush1.bf16.msra.mxu0 %v605
      %782 = vmatprep.subr.bf16.mxu0 0
      %783 = vmatpush1.bf16.msra.mxu0 0
      %784 = vmatprep.subr.bf16.mxu0 0
      %785 = vmatpush1.bf16.msra.mxu0 0
      %786 = vmatprep.subr.bf16.mxu0 0
      %787 = vmatpush1.bf16.msra.mxu0 0
      %788 = vmatprep.subr.bf16.mxu0 0
      %789 = vmatpush1.bf16.msra.mxu0 0
      %790 = vmatprep.subr.bf16.mxu0 0
      %791 = vmatpush1.bf16.msra.mxu0 0
      %792 = vmatprep.subr.bf16.mxu0 0
      %793 = vmatpush1.bf16.msra.mxu0 0
      %794 = vmatprep.subr.bf16.mxu0 0
      %795 = vmatpush1.bf16.msra.mxu0 0
      %796 = vmatprep.subr.bf16.mxu0 0
      %797 = vmatpush1.bf16.msra.mxu0 0
      %798 = vmatprep.mubr.bf16.mxu0 0
      %799 = vmatmul.mubr.bf16.gmra.mrb[0].mxu0 %v750
      %v800 = vpop.f32.mrb[0].mxu0
      %v801 = vadd.f32 %v641, %v800
      %v802 = vpop.f32.mrb[0].mxu0
      %v803 = vpop.f32.mrb[0].mxu0
      %v804 = vadd.f32 %v646, %v803
      %v805 = vpop.f32.mrb[0].mxu0
      %806 = vmatprep.mubr.bf16.mxu0 0
      %807 = vmatmul.mubr.bf16.gmra.mrb[0].mxu0 %v751
      %v808 = vpop.f32.mrb[0].mxu0
      %v809 = vadd.f32 %v651, %v808
      %v810 = vpop.f32.mrb[0].mxu0
      %v811 = vpop.f32.mrb[0].mxu0
      %v812 = vadd.f32 %v656, %v811
      %v813 = vpop.f32.mrb[0].mxu0
      %814 = vmatprep.mubr.bf16.mxu0 0
      %815 = vmatmul.mubr.bf16.gmra.mrb[0].mxu0 %v752
      %v816 = vpop.f32.mrb[0].mxu0
      %v817 = vadd.f32 %v661, %v816
      %v818 = vpop.f32.mrb[0].mxu0
      %v819 = vpop.f32.mrb[0].mxu0
      %v820 = vadd.f32 %v666, %v819
      %v821 = vpop.f32.mrb[0].mxu0
      %822 = vmatprep.mubr.bf16.mxu0 0
      %823 = vmatmul.mubr.bf16.gmra.mrb[0].mxu0 %v753
      %v824 = vpop.f32.mrb[0].mxu0
      %v825 = vadd.f32 %v671, %v824
      %v826 = vpop.f32.mrb[0].mxu0
      %v827 = vpop.f32.mrb[0].mxu0
      %v828 = vadd.f32 %v676, %v827
      %v829 = vpop.f32.mrb[0].mxu0
      %830 = vmatprep.mubr.bf16.mxu0 0
      %831 = vmatmul.mubr.bf16.gmra.mrb[0].mxu0 %v754
      %v832 = vpop.f32.mrb[0].mxu0
      %v833 = vadd.f32 %v681, %v832
      %v834 = vpop.f32.mrb[0].mxu0
      %v835 = vpop.f32.mrb[0].mxu0
      %v836 = vadd.f32 %v686, %v835
      %v837 = vpop.f32.mrb[0].mxu0
      %838 = vmatprep.mubr.bf16.mxu0 0
      %839 = vmatmul.mubr.bf16.gmra.mrb[0].mxu0 %v755
      %v840 = vpop.f32.mrb[0].mxu0
      %v841 = vadd.f32 %v691, %v840
      %v842 = vpop.f32.mrb[0].mxu0
      %v843 = vpop.f32.mrb[0].mxu0
      %v844 = vadd.f32 %v696, %v843
      %v845 = vpop.f32.mrb[0].mxu0
      %846 = vmatprep.mubr.bf16.mxu0 0
      %847 = vmatmul.mubr.bf16.gmra.mrb[0].mxu0 %v756
      %v848 = vpop.f32.mrb[0].mxu0
      %v849 = vadd.f32 %v701, %v848
      %v850 = vpop.f32.mrb[0].mxu0
      %v851 = vpop.f32.mrb[0].mxu0
      %v852 = vadd.f32 %v706, %v851
      %v853 = vpop.f32.mrb[0].mxu0
      %854 = vmatprep.mubr.bf16.mxu0 0
      %855 = vmatmul.mubr.bf16.gmra.mrb[0].mxu0 %v757
      %v856 = vpop.f32.mrb[0].mxu0
      %v857 = vadd.f32 %v711, %v856
      %v858 = vpop.f32.mrb[0].mxu0
      %v859 = vpop.f32.mrb[0].mxu0
      %v860 = vadd.f32 %v716, %v859
      %v861 = vpop.f32.mrb[0].mxu0
      %862 = vdwg.mxu0
      %v863 = vmax.f32 %v801, 0.0
      %v864 = vmax.f32 %v804, 0.0
      %v865 = vmax.f32 %v809, 0.0
      %v866 = vmax.f32 %v812, 0.0
      %v867 = vmax.f32 %v817, 0.0
      %v868 = vmax.f32 %v820, 0.0
      %v869 = vmax.f32 %v825, 0.0
      %v870 = vmax.f32 %v828, 0.0
      %v871 = vmax.f32 %v833, 0.0
      %v872 = vmax.f32 %v836, 0.0
      %v873 = vmax.f32 %v841, 0.0
      %v874 = vmax.f32 %v844, 0.0
      %v875 = vmax.f32 %v849, 0.0
      %v876 = vmax.f32 %v852, 0.0
      %v877 = vmax.f32 %v857, 0.0
      %v878 = vmax.f32 %v860, 0.0
      %v879 = vpack.c.bf16 %v864, %v863
      %v880 = vpack.c.bf16 %v866, %v865
      %v881 = vpack.c.bf16 %v868, %v867
      %v882 = vpack.c.bf16 %v870, %v869
      %v883 = vpack.c.bf16 %v872, %v871
      %v884 = vpack.c.bf16 %v874, %v873
      %v885 = vpack.c.bf16 %v876, %v875
      %v886 = vpack.c.bf16 %v878, %v877
      %v887 = vld [vmem:[%s5] sm:$0xf]
      %v888 = vld [vmem:[%s5 + $0x4] sm:$0xf]
      %v889 = vld [vmem:[%s5 + $0x8] sm:$0xf]
      %v890 = vld [vmem:[%s5 + $0xc] sm:$0xf]
      %v891 = vld [vmem:[%s5 + $0x10] sm:$0xf]
      %v892 = vld [vmem:[%s5 + $0x14] sm:$0xf]
      %v893 = vld [vmem:[%s5 + $0x18] sm:$0xf]
      %v894 = vld [vmem:[%s5 + $0x1c] sm:$0xf]
      %v895 = vld [vmem:[%s5 + $0x20] sm:$0xf]
      %v896 = vld [vmem:[%s5 + $0x24] sm:$0xf]
      %v897 = vld [vmem:[%s5 + $0x28] sm:$0xf]
      %v898 = vld [vmem:[%s5 + $0x2c] sm:$0xf]
      %v899 = vld [vmem:[%s5 + $0x30] sm:$0xf]
      %v900 = vld [vmem:[%s5 + $0x34] sm:$0xf]
      %v901 = vld [vmem:[%s5 + $0x38] sm:$0xf]
      %v902 = vld [vmem:[%s5 + $0x3c] sm:$0xf]
      %v903 = vld [vmem:[%s5 + $0x40] sm:$0xf]
      %v904 = vld [vmem:[%s5 + $0x44] sm:$0xf]
      %v905 = vld [vmem:[%s5 + $0x48] sm:$0xf]
      %v906 = vld [vmem:[%s5 + $0x4c] sm:$0xf]
      %v907 = vld [vmem:[%s5 + $0x50] sm:$0xf]
      %v908 = vld [vmem:[%s5 + $0x54] sm:$0xf]
      %v909 = vld [vmem:[%s5 + $0x58] sm:$0xf]
      %v910 = vld [vmem:[%s5 + $0x5c] sm:$0xf]
      %v911 = vld [vmem:[%s5 + $0x60] sm:$0xf]
      %v912 = vld [vmem:[%s5 + $0x64] sm:$0xf]
      %v913 = vld [vmem:[%s5 + $0x68] sm:$0xf]
      %v914 = vld [vmem:[%s5 + $0x6c] sm:$0xf]
      %v915 = vld [vmem:[%s5 + $0x70] sm:$0xf]
      %v916 = vld [vmem:[%s5 + $0x74] sm:$0xf]
      %v917 = vld [vmem:[%s5 + $0x78] sm:$0xf]
      %v918 = vld [vmem:[%s5 + $0x7c] sm:$0xf]
      %v919 = vld [vmem:[%s6] sm:$0xff]
      %v920 = vld [vmem:[%s6 + $0x8] sm:$0xff]
      %v921 = vld [vmem:[%s6 + $0x10] sm:$0xff]
      %v922 = vld [vmem:[%s6 + $0x18] sm:$0xff]
      %v923 = vld [vmem:[%s6 + $0x20] sm:$0xff]
      %v924 = vld [vmem:[%s6 + $0x28] sm:$0xff]
      %v925 = vld [vmem:[%s6 + $0x30] sm:$0xff]
      %v926 = vld [vmem:[%s6 + $0x38] sm:$0xff]
      %v927 = vld [vmem:[%s6 + $0x40] sm:$0xff]
      %v928 = vld [vmem:[%s6 + $0x48] sm:$0xff]
      %v929 = vld [vmem:[%s6 + $0x50] sm:$0xff]
      %v930 = vld [vmem:[%s6 + $0x58] sm:$0xff]
      %v931 = vld [vmem:[%s6 + $0x60] sm:$0xff]
      %v932 = vld [vmem:[%s6 + $0x68] sm:$0xff]
      %v933 = vld [vmem:[%s6 + $0x70] sm:$0xff]
      %v934 = vld [vmem:[%s6 + $0x78] sm:$0xff]
      %v935 = vld [vmem:[%s6 + $0x80] sm:$0xff]
      %v936 = vld [vmem:[%s6 + $0x88] sm:$0xff]
      %v937 = vld [vmem:[%s6 + $0x90] sm:$0xff]
      %v938 = vld [vmem:[%s6 + $0x98] sm:$0xff]
      %v939 = vld [vmem:[%s6 + $0xa0] sm:$0xff]
      %v940 = vld [vmem:[%s6 + $0xa8] sm:$0xff]
      %v941 = vld [vmem:[%s6 + $0xb0] sm:$0xff]
      %v942 = vld [vmem:[%s6 + $0xb8] sm:$0xff]
      %v943 = vld [vmem:[%s6 + $0xc0] sm:$0xff]
      %v944 = vld [vmem:[%s6 + $0xc8] sm:$0xff]
      %v945 = vld [vmem:[%s6 + $0xd0] sm:$0xff]
      %v946 = vld [vmem:[%s6 + $0xd8] sm:$0xff]
      %v947 = vld [vmem:[%s6 + $0xe0] sm:$0xff]
      %v948 = vld [vmem:[%s6 + $0xe8] sm:$0xff]
      %v949 = vld [vmem:[%s6 + $0xf0] sm:$0xff]
      %v950 = vld [vmem:[%s6 + $0xf8] sm:$0xff]
      %952 = vset.pattern.permute.xlu0 0
      %953 = vperm.xlu0 %952, %v919
      %v954 = vpop.permute.xlu0 %953
      %957 = vset.pattern.permute.xlu0 0
      %958 = vperm.xlu0 %957, %v920
      %v959 = vpop.permute.xlu0 %958
      %962 = vset.pattern.permute.xlu0 0
      %963 = vperm.xlu0 %962, %v921
      %v964 = vpop.permute.xlu0 %963
      %967 = vset.pattern.permute.xlu0 0
      %968 = vperm.xlu0 %967, %v922
      %v969 = vpop.permute.xlu0 %968
      %972 = vset.pattern.permute.xlu0 0
      %973 = vperm.xlu0 %972, %v923
      %v974 = vpop.permute.xlu0 %973
      %977 = vset.pattern.permute.xlu0 0
      %978 = vperm.xlu0 %977, %v924
      %v979 = vpop.permute.xlu0 %978
      %982 = vset.pattern.permute.xlu0 0
      %983 = vperm.xlu0 %982, %v925
      %v984 = vpop.permute.xlu0 %983
      %987 = vset.pattern.permute.xlu0 0
      %988 = vperm.xlu0 %987, %v926
      %v989 = vpop.permute.xlu0 %988
      %992 = vset.pattern.permute.xlu0 0
      %993 = vperm.xlu0 %992, %v927
      %v994 = vpop.permute.xlu0 %993
      %997 = vset.pattern.permute.xlu0 0
      %998 = vperm.xlu0 %997, %v928
      %v999 = vpop.permute.xlu0 %998
      %1002 = vset.pattern.permute.xlu0 0
      %1003 = vperm.xlu0 %1002, %v929
      %v1004 = vpop.permute.xlu0 %1003
      %1007 = vset.pattern.permute.xlu0 0
      %1008 = vperm.xlu0 %1007, %v930
      %v1009 = vpop.permute.xlu0 %1008
      %1012 = vset.pattern.permute.xlu0 0
      %1013 = vperm.xlu0 %1012, %v931
      %v1014 = vpop.permute.xlu0 %1013
      %1017 = vset.pattern.permute.xlu0 0
      %1018 = vperm.xlu0 %1017, %v932
      %v1019 = vpop.permute.xlu0 %1018
      %1022 = vset.pattern.permute.xlu0 0
      %1023 = vperm.xlu0 %1022, %v933
      %v1024 = vpop.permute.xlu0 %1023
      %1027 = vset.pattern.permute.xlu0 0
      %1028 = vperm.xlu0 %1027, %v934
      %v1029 = vpop.permute.xlu0 %1028
      %1032 = vset.pattern.permute.xlu0 0
      %1033 = vperm.xlu0 %1032, %v935
      %v1034 = vpop.permute.xlu0 %1033
      %1037 = vset.pattern.permute.xlu0 0
      %1038 = vperm.xlu0 %1037, %v936
      %v1039 = vpop.permute.xlu0 %1038
      %1042 = vset.pattern.permute.xlu0 0
      %1043 = vperm.xlu0 %1042, %v937
      %v1044 = vpop.permute.xlu0 %1043
      %1047 = vset.pattern.permute.xlu0 0
      %1048 = vperm.xlu0 %1047, %v938
      %v1049 = vpop.permute.xlu0 %1048
      %1052 = vset.pattern.permute.xlu0 0
      %1053 = vperm.xlu0 %1052, %v939
      %v1054 = vpop.permute.xlu0 %1053
      %1057 = vset.pattern.permute.xlu0 0
      %1058 = vperm.xlu0 %1057, %v940
      %v1059 = vpop.permute.xlu0 %1058
      %1062 = vset.pattern.permute.xlu0 0
      %1063 = vperm.xlu0 %1062, %v941
      %v1064 = vpop.permute.xlu0 %1063
      %1067 = vset.pattern.permute.xlu0 0
      %1068 = vperm.xlu0 %1067, %v942
      %v1069 = vpop.permute.xlu0 %1068
      %1072 = vset.pattern.permute.xlu0 0
      %1073 = vperm.xlu0 %1072, %v943
      %v1074 = vpop.permute.xlu0 %1073
      %1077 = vset.pattern.permute.xlu0 0
      %1078 = vperm.xlu0 %1077, %v944
      %v1079 = vpop.permute.xlu0 %1078
      %1082 = vset.pattern.permute.xlu0 0
      %1083 = vperm.xlu0 %1082, %v945
      %v1084 = vpop.permute.xlu0 %1083
      %1087 = vset.pattern.permute.xlu0 0
      %1088 = vperm.xlu0 %1087, %v946
      %v1089 = vpop.permute.xlu0 %1088
      %1092 = vset.pattern.permute.xlu0 0
      %1093 = vperm.xlu0 %1092, %v947
      %v1094 = vpop.permute.xlu0 %1093
      %1097 = vset.pattern.permute.xlu0 0
      %1098 = vperm.xlu0 %1097, %v948
      %v1099 = vpop.permute.xlu0 %1098
      %1102 = vset.pattern.permute.xlu0 0
      %1103 = vperm.xlu0 %1102, %v949
      %v1104 = vpop.permute.xlu0 %1103
      %1107 = vset.pattern.permute.xlu0 0
      %1108 = vperm.xlu0 %1107, %v950
      %v1109 = vpop.permute.xlu0 %1108
      %v1143 = vunpack.c.l.b16 %v887
      %v1144 = vunpack.c.l.b16 %v888
      %v1145 = vunpack.c.l.b16 %v889
      %v1146 = vunpack.c.l.b16 %v890
      %v1147 = vunpack.c.l.b16 %v891
      %v1148 = vunpack.c.l.b16 %v892
      %v1149 = vunpack.c.l.b16 %v893
      %v1150 = vunpack.c.l.b16 %v894
      %v1151 = vunpack.c.l.b16 %v895
      %v1152 = vunpack.c.l.b16 %v896
      %v1153 = vunpack.c.l.b16 %v897
      %v1154 = vunpack.c.l.b16 %v898
      %v1155 = vunpack.c.l.b16 %v899
      %v1156 = vunpack.c.l.b16 %v900
      %v1157 = vunpack.c.l.b16 %v901
      %v1158 = vunpack.c.l.b16 %v902
      %v1159 = vunpack.c.l.b16 %v903
      %v1160 = vunpack.c.l.b16 %v904
      %v1161 = vunpack.c.l.b16 %v905
      %v1162 = vunpack.c.l.b16 %v906
      %v1163 = vunpack.c.l.b16 %v907
      %v1164 = vunpack.c.l.b16 %v908
      %v1165 = vunpack.c.l.b16 %v909
      %v1166 = vunpack.c.l.b16 %v910
      %v1167 = vunpack.c.l.b16 %v911
      %v1168 = vunpack.c.l.b16 %v912
      %v1169 = vunpack.c.l.b16 %v913
      %v1170 = vunpack.c.l.b16 %v914
      %v1171 = vunpack.c.l.b16 %v915
      %v1172 = vunpack.c.l.b16 %v916
      %v1173 = vunpack.c.l.b16 %v917
      %v1174 = vunpack.c.l.b16 %v918
      %v1175 = vpack.c.b16 %v1144, %v1143
      %v1176 = vpack.c.b16 %v1146, %v1145
      %v1177 = vpack.c.b16 %v1148, %v1147
      %v1178 = vpack.c.b16 %v1150, %v1149
      %v1179 = vpack.c.b16 %v1152, %v1151
      %v1180 = vpack.c.b16 %v1154, %v1153
      %v1181 = vpack.c.b16 %v1156, %v1155
      %v1182 = vpack.c.b16 %v1158, %v1157
      %v1183 = vpack.c.b16 %v1160, %v1159
      %v1184 = vpack.c.b16 %v1162, %v1161
      %v1185 = vpack.c.b16 %v1164, %v1163
      %v1186 = vpack.c.b16 %v1166, %v1165
      %v1187 = vpack.c.b16 %v1168, %v1167
      %v1188 = vpack.c.b16 %v1170, %v1169
      %v1189 = vpack.c.b16 %v1172, %v1171
      %v1190 = vpack.c.b16 %v1174, %v1173
      %1207 = vmatprep.subr.bf16.mxu0 0
      %1208 = vmatpush1.bf16.msra.mxu0 %v879
      %1209 = vmatprep.subr.bf16.mxu0 0
      %1210 = vmatpush1.bf16.msra.mxu0 %v880
      %1211 = vmatprep.subr.bf16.mxu0 0
      %1212 = vmatpush1.bf16.msra.mxu0 %v881
      %1213 = vmatprep.subr.bf16.mxu0 0
      %1214 = vmatpush1.bf16.msra.mxu0 %v882
      %1215 = vmatprep.subr.bf16.mxu0 0
      %1216 = vmatpush1.bf16.msra.mxu0 %v883
      %1217 = vmatprep.subr.bf16.mxu0 0
      %1218 = vmatpush1.bf16.msra.mxu0 %v884
      %1219 = vmatprep.subr.bf16.mxu0 0
      %1220 = vmatpush1.bf16.msra.mxu0 %v885
      %1221 = vmatprep.subr.bf16.mxu0 0
      %1222 = vmatpush1.bf16.msra.mxu0 %v886
      %1223 = vmatprep.subr.bf16.mxu0 0
      %1224 = vmatpush1.bf16.msra.mxu0 0
      %1225 = vmatprep.subr.bf16.mxu0 0
      %1226 = vmatpush1.bf16.msra.mxu0 0
      %1227 = vmatprep.subr.bf16.mxu0 0
      %1228 = vmatpush1.bf16.msra.mxu0 0
      %1229 = vmatprep.subr.bf16.mxu0 0
      %1230 = vmatpush1.bf16.msra.mxu0 0
      %1231 = vmatprep.subr.bf16.mxu0 0
      %1232 = vmatpush1.bf16.msra.mxu0 0
      %1233 = vmatprep.subr.bf16.mxu0 0
      %1234 = vmatpush1.bf16.msra.mxu0 0
      %1235 = vmatprep.subr.bf16.mxu0 0
      %1236 = vmatpush1.bf16.msra.mxu0 0
      %1237 = vmatprep.subr.bf16.mxu0 0
      %1238 = vmatpush1.bf16.msra.mxu0 0
      %1239 = vmatprep.mubr.bf16.mxu0 0
      %1240 = vmatmul.mubr.bf16.gmra.mrb[0].mxu0 %v1175
      %v1241 = vpop.f32.mrb[0].mxu0
      %v1242 = vadd.f32 %v954, %v1241
      %v1243 = vpop.f32.mrb[0].mxu0
      %v1244 = vpop.f32.mrb[0].mxu0
      %v1245 = vadd.f32 %v959, %v1244
      %v1246 = vpop.f32.mrb[0].mxu0
      %1247 = vmatprep.mubr.bf16.mxu0 0
      %1248 = vmatmul.mubr.bf16.gmra.mrb[0].mxu0 %v1176
      %v1249 = vpop.f32.mrb[0].mxu0
      %v1250 = vadd.f32 %v964, %v1249
      %v1251 = vpop.f32.mrb[0].mxu0
      %v1252 = vpop.f32.mrb[0].mxu0
      %v1253 = vadd.f32 %v969, %v1252
      %v1254 = vpop.f32.mrb[0].mxu0
      %1255 = vmatprep.mubr.bf16.mxu0 0
      %1256 = vmatmul.mubr.bf16.gmra.mrb[0].mxu0 %v1177
      %v1257 = vpop.f32.mrb[0].mxu0
      %v1258 = vadd.f32 %v974, %v1257
      %v1259 = vpop.f32.mrb[0].mxu0
      %v1260 = vpop.f32.mrb[0].mxu0
      %v1261 = vadd.f32 %v979, %v1260
      %v1262 = vpop.f32.mrb[0].mxu0
      %1263 = vmatprep.mubr.bf16.mxu0 0
      %1264 = vmatmul.mubr.bf16.gmra.mrb[0].mxu0 %v1178
      %v1265 = vpop.f32.mrb[0].mxu0
      %v1266 = vadd.f32 %v984, %v1265
      %v1267 = vpop.f32.mrb[0].mxu0
      %v1268 = vpop.f32.mrb[0].mxu0
      %v1269 = vadd.f32 %v989, %v1268
      %v1270 = vpop.f32.mrb[0].mxu0
      %1271 = vmatprep.mubr.bf16.mxu0 0
      %1272 = vmatmul.mubr.bf16.gmra.mrb[0].mxu0 %v1179
      %v1273 = vpop.f32.mrb[0].mxu0
      %v1274 = vadd.f32 %v994, %v1273
      %v1275 = vpop.f32.mrb[0].mxu0
      %v1276 = vpop.f32.mrb[0].mxu0
      %v1277 = vadd.f32 %v999, %v1276
      %v1278 = vpop.f32.mrb[0].mxu0
      %1279 = vmatprep.mubr.bf16.mxu0 0
      %1280 = vmatmul.mubr.bf16.gmra.mrb[0].mxu0 %v1180
      %v1281 = vpop.f32.mrb[0].mxu0
      %v1282 = vadd.f32 %v1004, %v1281
      %v1283 = vpop.f32.mrb[0].mxu0
      %v1284 = vpop.f32.mrb[0].mxu0
      %v1285 = vadd.f32 %v1009, %v1284
      %v1286 = vpop.f32.mrb[0].mxu0
      %1287 = vmatprep.mubr.bf16.mxu0 0
      %1288 = vmatmul.mubr.bf16.gmra.mrb[0].mxu0 %v1181
      %v1289 = vpop.f32.mrb[0].mxu0
      %v1290 = vadd.f32 %v1014, %v1289
      %v1291 = vpop.f32.mrb[0].mxu0
      %v1292 = vpop.f32.mrb[0].mxu0
      %v1293 = vadd.f32 %v1019, %v1292
      %v1294 = vpop.f32.mrb[0].mxu0
      %1295 = vmatprep.mubr.bf16.mxu0 0
      %1296 = vmatmul.mubr.bf16.gmra.mrb[0].mxu0 %v1182
      %v1297 = vpop.f32.mrb[0].mxu0
      %v1298 = vadd.f32 %v1024, %v1297
      %v1299 = vpop.f32.mrb[0].mxu0
      %v1300 = vpop.f32.mrb[0].mxu0
      %v1301 = vadd.f32 %v1029, %v1300
      %v1302 = vpop.f32.mrb[0].mxu0
      %1303 = vmatprep.mubr.bf16.mxu0 0
      %1304 = vmatmul.mubr.bf16.gmra.mrb[0].mxu0 %v1183
      %v1305 = vpop.f32.mrb[0].mxu0
      %v1306 = vadd.f32 %v1034, %v1305
      %v1307 = vpop.f32.mrb[0].mxu0
      %v1308 = vpop.f32.mrb[0].mxu0
      %v1309 = vadd.f32 %v1039, %v1308
      %v1310 = vpop.f32.mrb[0].mxu0
      %1311 = vmatprep.mubr.bf16.mxu0 0
      %1312 = vmatmul.mubr.bf16.gmra.mrb[0].mxu0 %v1184
      %v1313 = vpop.f32.mrb[0].mxu0
      %v1314 = vadd.f32 %v1044, %v1313
      %v1315 = vpop.f32.mrb[0].mxu0
      %v1316 = vpop.f32.mrb[0].mxu0
      %v1317 = vadd.f32 %v1049, %v1316
      %v1318 = vpop.f32.mrb[0].mxu0
      %1319 = vmatprep.mubr.bf16.mxu0 0
      %1320 = vmatmul.mubr.bf16.gmra.mrb[0].mxu0 %v1185
      %v1321 = vpop.f32.mrb[0].mxu0
      %v1322 = vadd.f32 %v1054, %v1321
      %v1323 = vpop.f32.mrb[0].mxu0
      %v1324 = vpop.f32.mrb[0].mxu0
      %v1325 = vadd.f32 %v1059, %v1324
      %v1326 = vpop.f32.mrb[0].mxu0
      %1327 = vmatprep.mubr.bf16.mxu0 0
      %1328 = vmatmul.mubr.bf16.gmra.mrb[0].mxu0 %v1186
      %v1329 = vpop.f32.mrb[0].mxu0
      %v1330 = vadd.f32 %v1064, %v1329
      %v1331 = vpop.f32.mrb[0].mxu0
      %v1332 = vpop.f32.mrb[0].mxu0
      %v1333 = vadd.f32 %v1069, %v1332
      %v1334 = vpop.f32.mrb[0].mxu0
      %1335 = vmatprep.mubr.bf16.mxu0 0
      %1336 = vmatmul.mubr.bf16.gmra.mrb[0].mxu0 %v1187
      %v1337 = vpop.f32.mrb[0].mxu0
      %v1338 = vadd.f32 %v1074, %v1337
      %v1339 = vpop.f32.mrb[0].mxu0
      %v1340 = vpop.f32.mrb[0].mxu0
      %v1341 = vadd.f32 %v1079, %v1340
      %v1342 = vpop.f32.mrb[0].mxu0
      %1343 = vmatprep.mubr.bf16.mxu0 0
      %1344 = vmatmul.mubr.bf16.gmra.mrb[0].mxu0 %v1188
      %v1345 = vpop.f32.mrb[0].mxu0
      %v1346 = vadd.f32 %v1084, %v1345
      %v1347 = vpop.f32.mrb[0].mxu0
      %v1348 = vpop.f32.mrb[0].mxu0
      %v1349 = vadd.f32 %v1089, %v1348
      %v1350 = vpop.f32.mrb[0].mxu0
      %1351 = vmatprep.mubr.bf16.mxu0 0
      %1352 = vmatmul.mubr.bf16.gmra.mrb[0].mxu0 %v1189
      %v1353 = vpop.f32.mrb[0].mxu0
      %v1354 = vadd.f32 %v1094, %v1353
      %v1355 = vpop.f32.mrb[0].mxu0
      %v1356 = vpop.f32.mrb[0].mxu0
      %v1357 = vadd.f32 %v1099, %v1356
      %v1358 = vpop.f32.mrb[0].mxu0
      %1359 = vmatprep.mubr.bf16.mxu0 0
      %1360 = vmatmul.mubr.bf16.gmra.mrb[0].mxu0 %v1190
      %v1361 = vpop.f32.mrb[0].mxu0
      %v1362 = vadd.f32 %v1104, %v1361
      %v1363 = vpop.f32.mrb[0].mxu0
      %v1364 = vpop.f32.mrb[0].mxu0
      %v1365 = vadd.f32 %v1109, %v1364
      %v1366 = vpop.f32.mrb[0].mxu0
      %1367 = vdwg.mxu0
      %v1368 = vmax.f32 %v1242, 0.0
      %v1369 = vmax.f32 %v1245, 0.0
      %v1370 = vmax.f32 %v1250, 0.0
      %v1371 = vmax.f32 %v1253, 0.0
      %v1372 = vmax.f32 %v1258, 0.0
      %v1373 = vmax.f32 %v1261, 0.0
      %v1374 = vmax.f32 %v1266, 0.0
      %v1375 = vmax.f32 %v1269, 0.0
      %v1376 = vmax.f32 %v1274, 0.0
      %v1377 = vmax.f32 %v1277, 0.0
      %v1378 = vmax.f32 %v1282, 0.0
      %v1379 = vmax.f32 %v1285, 0.0
      %v1380 = vmax.f32 %v1290, 0.0
      %v1381 = vmax.f32 %v1293, 0.0
      %v1382 = vmax.f32 %v1298, 0.0
      %v1383 = vmax.f32 %v1301, 0.0
      %v1384 = vmax.f32 %v1306, 0.0
      %v1385 = vmax.f32 %v1309, 0.0
      %v1386 = vmax.f32 %v1314, 0.0
      %v1387 = vmax.f32 %v1317, 0.0
      %v1388 = vmax.f32 %v1322, 0.0
      %v1389 = vmax.f32 %v1325, 0.0
      %v1390 = vmax.f32 %v1330, 0.0
      %v1391 = vmax.f32 %v1333, 0.0
      %v1392 = vmax.f32 %v1338, 0.0
      %v1393 = vmax.f32 %v1341, 0.0
      %v1394 = vmax.f32 %v1346, 0.0
      %v1395 = vmax.f32 %v1349, 0.0
      %v1396 = vmax.f32 %v1354, 0.0
      %v1397 = vmax.f32 %v1357, 0.0
      %v1398 = vmax.f32 %v1362, 0.0
      %v1399 = vmax.f32 %v1365, 0.0
      %p1400 = scmp.eq.s32.totalorder %s23, 0
      // Predicated region
      $region49: #{tpu_custom_call.1} parent=47 // pred_check
        %p1401 = pneg %p1400
      $region50: #{tpu_custom_call.1} parent=47 // pred_check_branch
        %1403 = sbr.rel (%p1401) target = $region52
      $region51: #{tpu_custom_call.1} parent=47 // pred_region
        %vm1404 = vcmask 7168
        %1405 = vst.msk [vmem:[%s301] sm:$0xff] %vm1404, 0.0
        %1406 = vst.msk [vmem:[%s301 + $0x8] sm:$0xff] %vm1404, 0.0
        %1407 = vst.msk [vmem:[%s301 + $0x10] sm:$0xff] %vm1404, 0.0
        %1408 = vst.msk [vmem:[%s301 + $0x18] sm:$0xff] %vm1404, 0.0
        %1409 = vst.msk [vmem:[%s301 + $0x20] sm:$0xff] %vm1404, 0.0
        %1410 = vst.msk [vmem:[%s301 + $0x28] sm:$0xff] %vm1404, 0.0
        %1411 = vst.msk [vmem:[%s301 + $0x30] sm:$0xff] %vm1404, 0.0
        %1412 = vst.msk [vmem:[%s301 + $0x38] sm:$0xff] %vm1404, 0.0
        %1413 = vst.msk [vmem:[%s301 + $0x40] sm:$0xff] %vm1404, 0.0
        %1414 = vst.msk [vmem:[%s301 + $0x48] sm:$0xff] %vm1404, 0.0
        %1415 = vst.msk [vmem:[%s301 + $0x50] sm:$0xff] %vm1404, 0.0
        %1416 = vst.msk [vmem:[%s301 + $0x58] sm:$0xff] %vm1404, 0.0
        %1417 = vst.msk [vmem:[%s301 + $0x60] sm:$0xff] %vm1404, 0.0
        %1418 = vst.msk [vmem:[%s301 + $0x68] sm:$0xff] %vm1404, 0.0
        %1419 = vst.msk [vmem:[%s301 + $0x70] sm:$0xff] %vm1404, 0.0
        %1420 = vst.msk [vmem:[%s301 + $0x78] sm:$0xff] %vm1404, 0.0
        %1421 = vst.msk [vmem:[%s301 + $0x80] sm:$0xff] %vm1404, 0.0
        %1422 = vst.msk [vmem:[%s301 + $0x88] sm:$0xff] %vm1404, 0.0
        %1423 = vst.msk [vmem:[%s301 + $0x90] sm:$0xff] %vm1404, 0.0
        %1424 = vst.msk [vmem:[%s301 + $0x98] sm:$0xff] %vm1404, 0.0
        %1425 = vst.msk [vmem:[%s301 + $0xa0] sm:$0xff] %vm1404, 0.0
        %1426 = vst.msk [vmem:[%s301 + $0xa8] sm:$0xff] %vm1404, 0.0
        %1427 = vst.msk [vmem:[%s301 + $0xb0] sm:$0xff] %vm1404, 0.0
        %1428 = vst.msk [vmem:[%s301 + $0xb8] sm:$0xff] %vm1404, 0.0
        %1429 = vst.msk [vmem:[%s301 + $0xc0] sm:$0xff] %vm1404, 0.0
        %1430 = vst.msk [vmem:[%s301 + $0xc8] sm:$0xff] %vm1404, 0.0
        %1431 = vst.msk [vmem:[%s301 + $0xd0] sm:$0xff] %vm1404, 0.0
        %1432 = vst.msk [vmem:[%s301 + $0xd8] sm:$0xff] %vm1404, 0.0
        %1433 = vst.msk [vmem:[%s301 + $0xe0] sm:$0xff] %vm1404, 0.0
        %1434 = vst.msk [vmem:[%s301 + $0xe8] sm:$0xff] %vm1404, 0.0
        %1435 = vst.msk [vmem:[%s301 + $0xf0] sm:$0xff] %vm1404, 0.0
        %1436 = vst.msk [vmem:[%s301 + $0xf8] sm:$0xff] %vm1404, 0.0
      $region52: #{tpu_custom_call.1} parent=47 // pred_fallthru
        _
      %v1437 = vld [vmem:[%s301] sm:$0xff]
      %v1438 = vld [vmem:[%s301 + $0x8] sm:$0xff]
      %v1439 = vld [vmem:[%s301 + $0x10] sm:$0xff]
      %v1440 = vld [vmem:[%s301 + $0x18] sm:$0xff]
      %v1441 = vld [vmem:[%s301 + $0x20] sm:$0xff]
      %v1442 = vld [vmem:[%s301 + $0x28] sm:$0xff]
      %v1443 = vld [vmem:[%s301 + $0x30] sm:$0xff]
      %v1444 = vld [vmem:[%s301 + $0x38] sm:$0xff]
      %v1445 = vld [vmem:[%s301 + $0x40] sm:$0xff]
      %v1446 = vld [vmem:[%s301 + $0x48] sm:$0xff]
      %v1447 = vld [vmem:[%s301 + $0x50] sm:$0xff]
      %v1448 = vld [vmem:[%s301 + $0x58] sm:$0xff]
      %v1449 = vld [vmem:[%s301 + $0x60] sm:$0xff]
      %v1450 = vld [vmem:[%s301 + $0x68] sm:$0xff]
      %v1451 = vld [vmem:[%s301 + $0x70] sm:$0xff]
      %v1452 = vld [vmem:[%s301 + $0x78] sm:$0xff]
      %v1453 = vld [vmem:[%s301 + $0x80] sm:$0xff]
      %v1454 = vld [vmem:[%s301 + $0x88] sm:$0xff]
      %v1455 = vld [vmem:[%s301 + $0x90] sm:$0xff]
      %v1456 = vld [vmem:[%s301 + $0x98] sm:$0xff]
      %v1457 = vld [vmem:[%s301 + $0xa0] sm:$0xff]
      %v1458 = vld [vmem:[%s301 + $0xa8] sm:$0xff]
      %v1459 = vld [vmem:[%s301 + $0xb0] sm:$0xff]
      %v1460 = vld [vmem:[%s301 + $0xb8] sm:$0xff]
      %v1461 = vld [vmem:[%s301 + $0xc0] sm:$0xff]
      %v1462 = vld [vmem:[%s301 + $0xc8] sm:$0xff]
      %v1463 = vld [vmem:[%s301 + $0xd0] sm:$0xff]
      %v1464 = vld [vmem:[%s301 + $0xd8] sm:$0xff]
      %v1465 = vld [vmem:[%s301 + $0xe0] sm:$0xff]
      %v1466 = vld [vmem:[%s301 + $0xe8] sm:$0xff]
      %v1467 = vld [vmem:[%s301 + $0xf0] sm:$0xff]
      %v1468 = vld [vmem:[%s301 + $0xf8] sm:$0xff]
      %1469 = vmax.xlane.f32.xlu0 %v1368
      %v1470 = vpop.xlane.xlu0 %1469
      %1471 = vmax.xlane.f32.xlu0 %v1369
      %v1472 = vpop.xlane.xlu0 %1471
      %1473 = vmax.xlane.f32.xlu0 %v1370
      %v1474 = vpop.xlane.xlu0 %1473
      %1475 = vmax.xlane.f32.xlu0 %v1371
      %v1476 = vpop.xlane.xlu0 %1475
      %1477 = vmax.xlane.f32.xlu0 %v1372
      %v1478 = vpop.xlane.xlu0 %1477
      %1479 = vmax.xlane.f32.xlu0 %v1373
      %v1480 = vpop.xlane.xlu0 %1479
      %1481 = vmax.xlane.f32.xlu0 %v1374
      %v1482 = vpop.xlane.xlu0 %1481
      %1483 = vmax.xlane.f32.xlu0 %v1375
      %v1484 = vpop.xlane.xlu0 %1483
      %1485 = vmax.xlane.f32.xlu0 %v1376
      %v1486 = vpop.xlane.xlu0 %1485
      %1487 = vmax.xlane.f32.xlu0 %v1377
      %v1488 = vpop.xlane.xlu0 %1487
      %1489 = vmax.xlane.f32.xlu0 %v1378
      %v1490 = vpop.xlane.xlu0 %1489
      %1491 = vmax.xlane.f32.xlu0 %v1379
      %v1492 = vpop.xlane.xlu0 %1491
      %1493 = vmax.xlane.f32.xlu0 %v1380
      %v1494 = vpop.xlane.xlu0 %1493
      %1495 = vmax.xlane.f32.xlu0 %v1381
      %v1496 = vpop.xlane.xlu0 %1495
      %1497 = vmax.xlane.f32.xlu0 %v1382
      %v1498 = vpop.xlane.xlu0 %1497
      %1499 = vmax.xlane.f32.xlu0 %v1383
      %v1500 = vpop.xlane.xlu0 %1499
      %1501 = vmax.xlane.f32.xlu0 %v1384
      %v1502 = vpop.xlane.xlu0 %1501
      %1503 = vmax.xlane.f32.xlu0 %v1385
      %v1504 = vpop.xlane.xlu0 %1503
      %1505 = vmax.xlane.f32.xlu0 %v1386
      %v1506 = vpop.xlane.xlu0 %1505
      %1507 = vmax.xlane.f32.xlu0 %v1387
      %v1508 = vpop.xlane.xlu0 %1507
      %1509 = vmax.xlane.f32.xlu0 %v1388
      %v1510 = vpop.xlane.xlu0 %1509
      %1511 = vmax.xlane.f32.xlu0 %v1389
      %v1512 = vpop.xlane.xlu0 %1511
      %1513 = vmax.xlane.f32.xlu0 %v1390
      %v1514 = vpop.xlane.xlu0 %1513
      %1515 = vmax.xlane.f32.xlu0 %v1391
      %v1516 = vpop.xlane.xlu0 %1515
      %1517 = vmax.xlane.f32.xlu0 %v1392
      %v1518 = vpop.xlane.xlu0 %1517
      %1519 = vmax.xlane.f32.xlu0 %v1393
      %v1520 = vpop.xlane.xlu0 %1519
      %1521 = vmax.xlane.f32.xlu0 %v1394
      %v1522 = vpop.xlane.xlu0 %1521
      %1523 = vmax.xlane.f32.xlu0 %v1395
      %v1524 = vpop.xlane.xlu0 %1523
      %1525 = vmax.xlane.f32.xlu0 %v1396
      %v1526 = vpop.xlane.xlu0 %1525
      %1527 = vmax.xlane.f32.xlu0 %v1397
      %v1528 = vpop.xlane.xlu0 %1527
      %1529 = vmax.xlane.f32.xlu0 %v1398
      %v1530 = vpop.xlane.xlu0 %1529
      %1531 = vmax.xlane.f32.xlu0 %v1399
      %v1532 = vpop.xlane.xlu0 %1531
      %v1533 = vmax.f32 %v1437, %v1470
      %v1534 = vmax.f32 %v1438, %v1472
      %v1535 = vmax.f32 %v1439, %v1474
      %v1536 = vmax.f32 %v1440, %v1476
      %v1537 = vmax.f32 %v1441, %v1478
      %v1538 = vmax.f32 %v1442, %v1480
      %v1539 = vmax.f32 %v1443, %v1482
      %v1540 = vmax.f32 %v1444, %v1484
      %v1541 = vmax.f32 %v1445, %v1486
      %v1542 = vmax.f32 %v1446, %v1488
      %v1543 = vmax.f32 %v1447, %v1490
      %v1544 = vmax.f32 %v1448, %v1492
      %v1545 = vmax.f32 %v1449, %v1494
      %v1546 = vmax.f32 %v1450, %v1496
      %v1547 = vmax.f32 %v1451, %v1498
      %v1548 = vmax.f32 %v1452, %v1500
      %v1549 = vmax.f32 %v1453, %v1502
      %v1550 = vmax.f32 %v1454, %v1504
      %v1551 = vmax.f32 %v1455, %v1506
      %v1552 = vmax.f32 %v1456, %v1508
      %v1553 = vmax.f32 %v1457, %v1510
      %v1554 = vmax.f32 %v1458, %v1512
      %v1555 = vmax.f32 %v1459, %v1514
      %v1556 = vmax.f32 %v1460, %v1516
      %v1557 = vmax.f32 %v1461, %v1518
      %v1558 = vmax.f32 %v1462, %v1520
      %v1559 = vmax.f32 %v1463, %v1522
      %v1560 = vmax.f32 %v1464, %v1524
      %v1561 = vmax.f32 %v1465, %v1526
      %v1562 = vmax.f32 %v1466, %v1528
      %v1563 = vmax.f32 %v1467, %v1530
      %v1564 = vmax.f32 %v1468, %v1532
      %vm1565 = vcmask 7168
      %1566 = vst.msk [vmem:[%s301] sm:$0xff] %vm1565, %v1533
      %1567 = vst.msk [vmem:[%s301 + $0x8] sm:$0xff] %vm1565, %v1534
      %1568 = vst.msk [vmem:[%s301 + $0x10] sm:$0xff] %vm1565, %v1535
      %1569 = vst.msk [vmem:[%s301 + $0x18] sm:$0xff] %vm1565, %v1536
      %1570 = vst.msk [vmem:[%s301 + $0x20] sm:$0xff] %vm1565, %v1537
      %1571 = vst.msk [vmem:[%s301 + $0x28] sm:$0xff] %vm1565, %v1538
      %1572 = vst.msk [vmem:[%s301 + $0x30] sm:$0xff] %vm1565, %v1539
      %1573 = vst.msk [vmem:[%s301 + $0x38] sm:$0xff] %vm1565, %v1540
      %1574 = vst.msk [vmem:[%s301 + $0x40] sm:$0xff] %vm1565, %v1541
      %1575 = vst.msk [vmem:[%s301 + $0x48] sm:$0xff] %vm1565, %v1542
      %1576 = vst.msk [vmem:[%s301 + $0x50] sm:$0xff] %vm1565, %v1543
      %1577 = vst.msk [vmem:[%s301 + $0x58] sm:$0xff] %vm1565, %v1544
      %1578 = vst.msk [vmem:[%s301 + $0x60] sm:$0xff] %vm1565, %v1545
      %1579 = vst.msk [vmem:[%s301 + $0x68] sm:$0xff] %vm1565, %v1546
      %1580 = vst.msk [vmem:[%s301 + $0x70] sm:$0xff] %vm1565, %v1547
      %1581 = vst.msk [vmem:[%s301 + $0x78] sm:$0xff] %vm1565, %v1548
      %1582 = vst.msk [vmem:[%s301 + $0x80] sm:$0xff] %vm1565, %v1549
      %1583 = vst.msk [vmem:[%s301 + $0x88] sm:$0xff] %vm1565, %v1550
      %1584 = vst.msk [vmem:[%s301 + $0x90] sm:$0xff] %vm1565, %v1551
      %1585 = vst.msk [vmem:[%s301 + $0x98] sm:$0xff] %vm1565, %v1552
      %1586 = vst.msk [vmem:[%s301 + $0xa0] sm:$0xff] %vm1565, %v1553
      %1587 = vst.msk [vmem:[%s301 + $0xa8] sm:$0xff] %vm1565, %v1554
      %1588 = vst.msk [vmem:[%s301 + $0xb0] sm:$0xff] %vm1565, %v1555
      %1589 = vst.msk [vmem:[%s301 + $0xb8] sm:$0xff] %vm1565, %v1556
      %1590 = vst.msk [vmem:[%s301 + $0xc0] sm:$0xff] %vm1565, %v1557
      %1591 = vst.msk [vmem:[%s301 + $0xc8] sm:$0xff] %vm1565, %v1558
      %1592 = vst.msk [vmem:[%s301 + $0xd0] sm:$0xff] %vm1565, %v1559
      %1593 = vst.msk [vmem:[%s301 + $0xd8] sm:$0xff] %vm1565, %v1560
      %1594 = vst.msk [vmem:[%s301 + $0xe0] sm:$0xff] %vm1565, %v1561
      %1595 = vst.msk [vmem:[%s301 + $0xe8] sm:$0xff] %vm1565, %v1562
      %1596 = vst.msk [vmem:[%s301 + $0xf0] sm:$0xff] %vm1565, %v1563
      %1597 = vst.msk [vmem:[%s301 + $0xf8] sm:$0xff] %vm1565, %v1564
      %p1598 = scmp.lt.s32.totalorder %s22, 1
      %s1599 = scalar_select %p1598, %s22, 1
      %s1600 = smul.addr %s1599, 32
      %s1601 = smul.addr %s1600, 8
      %s1602 = scalar_lea.vmem %s7, %s1601
      // Predicated region
      $region53: #{tpu_custom_call.1} parent=47 // pred_check
        %p1603 = pneg %p202
      $region54: #{tpu_custom_call.1} parent=47 // pred_check_branch
        %1605 = sbr.rel (%p1603) target = $region56
      $region55: #{tpu_custom_call.1} parent=47 // pred_region
        _
      $region56: #{tpu_custom_call.1} parent=47 // pred_fallthru
        _
    $region48: #{tpu_custom_call.1} parent=5 // pred_fallthru
      _
    %p1606 = scmp.le.s32.totalorder 2, %s13
    // Predicated region
    $region57: #{tpu_custom_call.1} parent=5 // pred_check
      %p1607 = pneg %p1606
    $region58: #{tpu_custom_call.1} parent=5 // pred_check_branch
      %1609 = sbr.rel (%p1607) target = $region60
    $region59: #{tpu_custom_call.1} parent=5 // pred_region
      %s1610 = ssub.s32 %s13, 2
      // Predicated region
      $region61: #{tpu_custom_call.1} parent=59 // pred_check
        %p1611 = pneg %p208
      $region62: #{tpu_custom_call.1} parent=59 // pred_check_branch
        %1613 = sbr.rel (%p1611) target = $region64
      $region63: #{tpu_custom_call.1} parent=59 // pred_region
        %p1614 = scmp.lt.s32.totalorder %s24, 1
        %s1615 = scalar_select %p1614, %s24, 1
        %s1616 = smul.addr %s1615, 32
        %s1617 = smul.addr %s1616, 8
        %s1618 = scalar_lea.vmem %s7, %s1617
      $region64: #{tpu_custom_call.1} parent=59 // pred_fallthru
        _
    $region60: #{tpu_custom_call.1} parent=5 // pred_fallthru
      _
  $region6: #{tpu_custom_call.1} parent=0 // loop_footer
    %s17 = sadd.s32 1, %s13
  $region7: #{tpu_custom_call.1} parent=0 // loop_footer_branch
    %12 = sbr.rel target = $region3
  $region8: #{tpu_custom_call.1} parent=0 // loop_exit
    _

</llo_original>
